<compile_context>
chip_gen: v7x
topology: tpu7x:2x2x1
jax: 0.10.0
libtpu: 0.0.40
codegen_flags: <defaults>
</compile_context>

<pallas_src>
import jax
import jax.numpy as jnp
from jax.experimental import pallas as pl
from jax.experimental.pallas import tpu as pltpu

Z_DIM = 64
HIDDEN = 256
IMG_DIM = 784  # 28*28 MNIST image, as in the reference training script


def _round_up(n, m):
    return ((n + m - 1) // m) * m


def _generator_kernel(x_ref, w1_ref, b1_ref, w2_ref, b2_ref, o_ref):
    # First linear layer: (TB, z) @ (z, 256) + (1, 256).  bf16 MXU, f32 acc.
    x = x_ref[...].astype(jnp.bfloat16)
    h = jnp.dot(x, w1_ref[...], preferred_element_type=jnp.float32)
    h = h + b1_ref[...]
    # LeakyReLU(0.01) in f32 (VPU).
    h = jnp.where(h >= 0, h, 0.01 * h)
    # Second linear layer: (TB, 256) @ (256, N_pad) + (1, N_pad).
    y = jnp.dot(h.astype(jnp.bfloat16), w2_ref[...],
                preferred_element_type=jnp.float32)
    y = y + b2_ref[...]
    # Tanh in f32 (EUP), lane-dense store.
    o_ref[...] = jnp.tanh(y).astype(o_ref.dtype)


def generator_forward(x, w1, b1, w2, b2, *, block_b=256):
    """x: (B, z_dim); w1: (z_dim, 256); b1: (256,); w2: (256, img_dim); b2: (img_dim,).

    Weights are stored as (in, out) so y = x @ W + b == PyTorch's x @ W.T + b.
    Returns (B, img_dim) float32.
    """
    B, z = x.shape
    hidden = w1.shape[1]
    img_dim = w2.shape[1]

    # --- Pad the output/feature dim to a lane-dense multiple of 128 (784 -> 896).
    n_pad = _round_up(img_dim, 128)
    if n_pad != img_dim:
        w2 = jnp.pad(w2, ((0, 0), (0, n_pad - img_dim)))
        b2 = jnp.pad(b2, (0, n_pad - img_dim))

    # --- bf16 weights: halves the dominant weight DMA; biases stay f32 (tiny).
    w1 = w1.astype(jnp.bfloat16)
    w2 = w2.astype(jnp.bfloat16)
    b1_2d = b1.reshape(1, -1).astype(jnp.float32)
    b2_2d = b2.reshape(1, -1).astype(jnp.float32)

    # --- Batch tiling: weights VMEM-resident across grid steps, x/out stream.
    tb = min(block_b, _round_up(B, 8))
    b_padded = _round_up(B, tb)
    if b_padded != B:
        x = jnp.pad(x, ((0, b_padded - B), (0, 0)))
    grid = (b_padded // tb,)

    out = pl.pallas_call(
        _generator_kernel,
        out_shape=jax.ShapeDtypeStruct((b_padded, n_pad), jnp.float32),
        grid_spec=pltpu.PrefetchScalarGridSpec(
            num_scalar_prefetch=0,
            grid=grid,
            in_specs=[
                pl.BlockSpec((tb, z), lambda i: (i, 0)),        # x tile streams
                pl.BlockSpec((z, hidden), lambda i: (0, 0)),    # w1 resident
                pl.BlockSpec((1, hidden), lambda i: (0, 0)),    # b1 resident
                pl.BlockSpec((hidden, n_pad), lambda i: (0, 0)),# w2 resident
                pl.BlockSpec((1, n_pad), lambda i: (0, 0)),     # b2 resident
            ],
            out_specs=pl.BlockSpec((tb, n_pad), lambda i: (i, 0)),
        ),
        compiler_params=pltpu.CompilerParams(
            # Batch tiles are independent: shard across v7x's 2 TensorCores.
            dimension_semantics=("parallel",),
        ),
    )(x, w1, b1_2d, w2, b2_2d)

    # Drop batch padding and lane padding.
    return out[:B, :img_dim]


def init_generator_params(key, z_dim=Z_DIM, hidden=HIDDEN, img_dim=IMG_DIM):
    """Deterministic init mimicking nn.Linear default (uniform +/- 1/sqrt(fan_in))."""
    k1, k2, k3, k4 = jax.random.split(key, 4)
    lim1 = 1.0 / jnp.sqrt(jnp.float32(z_dim))
    lim2 = 1.0 / jnp.sqrt(jnp.float32(hidden))
    # Stored as (in, out) — transpose of PyTorch's (out, in).
    w1 = jax.random.uniform(k1, (z_dim, hidden), jnp.float32, -lim1, lim1)
    b1 = jax.random.uniform(k2, (hidden,), jnp.float32, -lim1, lim1)
    w2 = jax.random.uniform(k3, (hidden, img_dim), jnp.float32, -lim2, lim2)
    b2 = jax.random.uniform(k4, (img_dim,), jnp.float32, -lim2, lim2)
    return w1, b1, w2, b2


def _reference_forward(x, w1, b1, w2, b2):
    h = x @ w1 + b1
    h = jnp.where(h >= 0, h, 0.01 * h)
    return jnp.tanh(h @ w2 + b2)


if __name__ == "__main__":
    key = jax.random.PRNGKey(0)
    kx, kp = jax.random.split(key)

    # B=200 with block_b=128 exercises both batch padding (200 -> 256) and a
    # multi-step grid (2 batch tiles) while staying small.
    B = 200
    x = jax.random.normal(kx, (B, Z_DIM), jnp.float32)
    w1, b1, w2, b2 = init_generator_params(kp)

    out = generator_forward(x, w1, b1, w2, b2, block_b=128)
    out = jax.block_until_ready(out)

    # Sanity check against a pure-JAX reference using the same bf16-rounded
    # weights (kernel runs the MXU in bf16, so tolerances are relaxed).
    w1_b = w1.astype(jnp.bfloat16).astype(jnp.float32)
    w2_b = w2.astype(jnp.bfloat16).astype(jnp.float32)
    ref = _reference_forward(x, w1_b, b1, w2_b, b2)

    assert out.shape == (B, IMG_DIM)
    assert jnp.allclose(out, ref, atol=3e-2, rtol=3e-2), "mismatch vs reference"

    print("KERNEL_OK")
</pallas_src>

<mosaic_0001>
module attributes {stable_mosaic.version = 11 : i64} {
  func.func @_generator_kernel(%arg0: i32, %arg1: memref<128x64xf32, #tpu.memory_space<vmem>>, %arg2: memref<64x256xbf16, #tpu.memory_space<vmem>>, %arg3: memref<1x256xf32, #tpu.memory_space<vmem>>, %arg4: memref<256x896xbf16, #tpu.memory_space<vmem>>, %arg5: memref<1x896xf32, #tpu.memory_space<vmem>>, %arg6: memref<128x896xf32, #tpu.memory_space<vmem>>) attributes {dimension_semantics = [#tpu.dimension_semantics<parallel>], iteration_bounds = array<i64: 2>, scalar_prefetch = 0 : i64, scratch_operands = 0 : i64, tpu.core_type = #tpu.core_type<tc>, window_params = [{transform_indices = @transform_0, window_bounds = array<i64: 128, 64>}, {pipeline_mode = #tpu.pipeline_mode<synchronous>, transform_indices = @transform_1, window_bounds = array<i64: 64, 256>}, {pipeline_mode = #tpu.pipeline_mode<synchronous>, transform_indices = @transform_2, window_bounds = array<i64: 1, 256>}, {pipeline_mode = #tpu.pipeline_mode<synchronous>, transform_indices = @transform_3, window_bounds = array<i64: 256, 896>}, {pipeline_mode = #tpu.pipeline_mode<synchronous>, transform_indices = @transform_4, window_bounds = array<i64: 1, 896>}, {transform_indices = @transform_5, window_bounds = array<i64: 128, 896>}]} {
    %c0 = arith.constant 0 : index
    %c0_0 = arith.constant 0 : index
    %0 = vector.load %arg1[%c0, %c0_0] : memref<128x64xf32, #tpu.memory_space<vmem>>, vector<128x64xf32>
    %1 = arith.truncf %0 : vector<128x64xf32> to vector<128x64xbf16>
    %c0_1 = arith.constant 0 : index
    %c0_2 = arith.constant 0 : index
    %2 = vector.load %arg2[%c0_1, %c0_2] : memref<64x256xbf16, #tpu.memory_space<vmem>>, vector<64x256xbf16>
    %cst = arith.constant dense<0.000000e+00> : vector<128x256xf32>
    %3 = tpu.matmul %1, %2, %cst {dimension_numbers = #tpu.dot_dimension_numbers<[1], [0], [0], [1], [0, 0, 1, 1], [], []>} : vector<128x64xbf16>, vector<64x256xbf16>, vector<128x256xf32> -> vector<128x256xf32>
    %c0_3 = arith.constant 0 : index
    %c0_4 = arith.constant 0 : index
    %4 = vector.load %arg3[%c0_3, %c0_4] : memref<1x256xf32, #tpu.memory_space<vmem>>, vector<1x256xf32>
    %5 = vector.broadcast %4 : vector<1x256xf32> to vector<128x256xf32>
    %6 = arith.addf %3, %5 : vector<128x256xf32>
    %cst_5 = arith.constant 0.000000e+00 : f32
    %7 = vector.broadcast %cst_5 : f32 to vector<128x256xf32>
    %8 = arith.cmpf oge, %6, %7 : vector<128x256xf32>
    %cst_6 = arith.constant 0.00999999977 : f32
    %9 = vector.broadcast %cst_6 : f32 to vector<128x256xf32>
    %10 = arith.mulf %9, %6 : vector<128x256xf32>
    %11 = arith.select %8, %6, %10 : vector<128x256xi1>, vector<128x256xf32>
    %12 = arith.truncf %11 : vector<128x256xf32> to vector<128x256xbf16>
    %c0_7 = arith.constant 0 : index
    %c0_8 = arith.constant 0 : index
    %13 = vector.load %arg4[%c0_7, %c0_8] : memref<256x896xbf16, #tpu.memory_space<vmem>>, vector<256x896xbf16>
    %cst_9 = arith.constant dense<0.000000e+00> : vector<128x896xf32>
    %14 = tpu.matmul %12, %13, %cst_9 {dimension_numbers = #tpu.dot_dimension_numbers<[1], [0], [0], [1], [0, 0, 1, 1], [], []>} : vector<128x256xbf16>, vector<256x896xbf16>, vector<128x896xf32> -> vector<128x896xf32>
    %c0_10 = arith.constant 0 : index
    %c0_11 = arith.constant 0 : index
    %15 = vector.load %arg5[%c0_10, %c0_11] : memref<1x896xf32, #tpu.memory_space<vmem>>, vector<1x896xf32>
    %16 = vector.broadcast %15 : vector<1x896xf32> to vector<128x896xf32>
    %17 = arith.addf %14, %16 : vector<128x896xf32>
    %18 = math.tanh %17 : vector<128x896xf32>
    %c0_12 = arith.constant 0 : index
    %c0_13 = arith.constant 0 : index
    %19 = vector.load %arg6[%c0_12, %c0_13] : memref<128x896xf32, #tpu.memory_space<vmem>>, vector<128x896xf32>
    tpu.vector_store %arg6[%c0_12, %c0_13], %18 {strides = array<i32>} : memref<128x896xf32, #tpu.memory_space<vmem>>, vector<128x896xf32>,
    return
  }
  func.func @transform_0(%arg0: i32) -> (i32, i32) {
    %c0_i32 = arith.constant 0 : i32
    %c0_i32_0 = arith.constant 0 : i32
    return %arg0, %c0_i32 : i32, i32
  }
  func.func @transform_1(%arg0: i32) -> (i32, i32) {
    %c0_i32 = arith.constant 0 : i32
    %c0_i32_0 = arith.constant 0 : i32
    %c0_i32_1 = arith.constant 0 : i32
    return %c0_i32, %c0_i32_0 : i32, i32
  }
  func.func @transform_2(%arg0: i32) -> (i32, i32) {
    %c0_i32 = arith.constant 0 : i32
    %c0_i32_0 = arith.constant 0 : i32
    %c0_i32_1 = arith.constant 0 : i32
    return %c0_i32, %c0_i32_0 : i32, i32
  }
  func.func @transform_3(%arg0: i32) -> (i32, i32) {
    %c0_i32 = arith.constant 0 : i32
    %c0_i32_0 = arith.constant 0 : i32
    %c0_i32_1 = arith.constant 0 : i32
    return %c0_i32, %c0_i32_0 : i32, i32
  }
  func.func @transform_4(%arg0: i32) -> (i32, i32) {
    %c0_i32 = arith.constant 0 : i32
    %c0_i32_0 = arith.constant 0 : i32
    %c0_i32_1 = arith.constant 0 : i32
    return %c0_i32, %c0_i32_0 : i32, i32
  }
  func.func @transform_5(%arg0: i32) -> (i32, i32) {
    %c0_i32 = arith.constant 0 : i32
    %c0_i32_0 = arith.constant 0 : i32
    return %arg0, %c0_i32 : i32, i32
  }
}

</mosaic_0001>

<llo_original>
// kernel: tpu_custom_call.1
$region0: #{tpu_custom_call.1}
  #allocation0 [shape = 'u32[]', space=smem, size = 0x4, offset = 0x4, fixed_abs, tag = 'smem constant byte address 0x4 - core index']
  #allocation1 [shape = 'u32[144,128]{1,0:T(1,128)}', space=vmem, size = 0x12000, scoped, tag = 'internal scratch']
  %s0 = inlined_call_operand.vmem [shape: f32[256,64], index: 0, kind: input, shape index: {}]
  %s1 = inlined_call_operand.vmem [shape: bf16[64,256], index: 1, kind: input, shape index: {}]
  %s2 = inlined_call_operand.vmem [shape: f32[1,256], index: 2, kind: input, shape index: {}]
  %s3 = inlined_call_operand.hbm [shape: bf16[256,896], index: 3, kind: input, shape index: {}]
  %s4 = inlined_call_operand.vmem [shape: f32[1,896], index: 4, kind: input, shape index: {}]
  %s5 = inlined_call_operand.hbm [shape: f32[256,896], index: 5, kind: output, shape index: {}]
  %s6 = sld [smem:[#allocation0]]
  $region57: #{tpu_custom_call.1} parent=0
    _
  %s8 = ssub.s32 1, %s6
  %s9 = scalar_select 0, %s8, %s6
  $region1: #{tpu_custom_call.1} parent=0
    #allocation2 [shape = 'u8[458752]{0}', space=vmem, size = 0x70000, scoped, tag = 'input window, operand 3, single buffered']
    #allocation3 [shape = 's32[2]{0}', space=sflag, size = 0x8, scoped, tag = 'scoped memory for tpu_custom_call.1']
    #allocation4 [shape = 's32[2]{0}', space=sflag, size = 0x8, scoped, tag = 'scoped memory for tpu_custom_call.1']
    #allocation5 [shape = 'u8[917504]{0}', space=vmem, size = 0xe0000, scoped, tag = 'output window, operand 0']
    %10 = vsyncpa [#allocation3], 0
    %11 = vsyncpa [#allocation4], 0
    %s12 = scalar_lea.sflag [#allocation4], 1
    %13 = vsyncpa %s12, 0
    loop: start=0, step=1, limit=4
    $region2: #{tpu_custom_call.1} parent=1 // loop_pre_header
      _
    $region3: #{tpu_custom_call.1} parent=1 // loop_header
      %s15 = sphi 0, %s19
      %p16 = scmp.ge.s32.totalorder %s15, 4
      %s25 = sphi 0, %s27
      %s28 = sphi 0, %s25
      %s29 = sphi 0, %s28
      %s45 = sphi 0, %s29
      %s49 = sphi 0, %s49
      %s51 = sphi 0, %s49
      %s52 = sphi 0, %s51
      %s66 = sphi 0, %s52
      %s70 = sphi 0, %s70
      %s72 = sphi 0, %s70
      %s73 = sphi 0, %s72
      %s87 = sphi 0, %s73
      %s91 = sphi 0, %s91
      %s93 = sphi 0, %s91
      %s94 = sphi 0, %s93
      %s108 = sphi 0, %s94
      %s112 = sphi 0, %s112
      %s114 = sphi 0, %s112
      %s115 = sphi 0, %s114
      %s129 = sphi 0, %s115
      %s135 = sphi 0, %s137
      %s138 = sphi 0, %s135
      %s139 = sphi 0, %s138
      %s155 = sphi 0, %s139
    $region4: #{tpu_custom_call.1} parent=1 // loop_header_branch
      %18 = sbr.rel (%p16) target = $region8
    $region5: #{tpu_custom_call.1} parent=1 // loop_body
      %s20 = ssub.s32 %s15, 1
      %s21 = ssub.s32 %s15, 2
      %s22 = sadd.s32 %s15, 1
      %s23 = ssub.s32 %s15, %s22
      %p24 = scmp.eq.s32.totalorder %s23, 0
      %s26 = sadd.s32 %s25, 1
      %s27 = scalar_select %p24, %s25, %s26
      %p30 = pneg %p24
      %p31 = scmp.eq.s32.totalorder %s15, 1
      %p32 = por %p30, %p31
      %p33 = scmp.ne.s32.totalorder %s25, %s28
      %p34 = scmp.eq.s32.totalorder %s15, 0
      %p35 = por %p33, %p34
      %p36 = scmp.ne.s32.totalorder %s25, %s28
      %p37 = scmp.eq.s32.totalorder %s20, 1
      %p38 = por %p36, %p37
      %p39 = scmp.ne.s32.totalorder %s28, %s29
      %p40 = scmp.eq.s32.totalorder %s20, 0
      %p41 = por %p39, %p40
      %p42 = scmp.ne.s32.totalorder %s28, %s29
      %p43 = scmp.eq.s32.totalorder %s21, 1
      %p44 = por %p42, %p43
      %p46 = scmp.ne.s32.totalorder %s29, %s45
      %p47 = scmp.eq.s32.totalorder %s21, 0
      %p48 = por %p46, %p47
      %s50 = sadd.s32 %s49, 1
      %p53 = scmp.eq.s32.totalorder %s15, 1
      %p54 = scmp.ne.s32.totalorder %s49, %s51
      %p55 = scmp.eq.s32.totalorder %s15, 0
      %p56 = por %p54, %p55
      %p57 = scmp.ne.s32.totalorder %s49, %s51
      %p58 = scmp.eq.s32.totalorder %s20, 1
      %p59 = por %p57, %p58
      %p60 = scmp.ne.s32.totalorder %s51, %s52
      %p61 = scmp.eq.s32.totalorder %s20, 0
      %p62 = por %p60, %p61
      %p63 = scmp.ne.s32.totalorder %s51, %s52
      %p64 = scmp.eq.s32.totalorder %s21, 1
      %p65 = por %p63, %p64
      %p67 = scmp.ne.s32.totalorder %s52, %s66
      %p68 = scmp.eq.s32.totalorder %s21, 0
      %p69 = por %p67, %p68
      %s71 = sadd.s32 %s70, 1
      %p74 = scmp.eq.s32.totalorder %s15, 1
      %p75 = scmp.ne.s32.totalorder %s70, %s72
      %p76 = scmp.eq.s32.totalorder %s15, 0
      %p77 = por %p75, %p76
      %p78 = scmp.ne.s32.totalorder %s70, %s72
      %p79 = scmp.eq.s32.totalorder %s20, 1
      %p80 = por %p78, %p79
      %p81 = scmp.ne.s32.totalorder %s72, %s73
      %p82 = scmp.eq.s32.totalorder %s20, 0
      %p83 = por %p81, %p82
      %p84 = scmp.ne.s32.totalorder %s72, %s73
      %p85 = scmp.eq.s32.totalorder %s21, 1
      %p86 = por %p84, %p85
      %p88 = scmp.ne.s32.totalorder %s73, %s87
      %p89 = scmp.eq.s32.totalorder %s21, 0
      %p90 = por %p88, %p89
      %s92 = sadd.s32 %s91, 1
      %p95 = scmp.eq.s32.totalorder %s15, 1
      %p96 = scmp.ne.s32.totalorder %s91, %s93
      %p97 = scmp.eq.s32.totalorder %s15, 0
      %p98 = por %p96, %p97
      %p99 = scmp.ne.s32.totalorder %s91, %s93
      %p100 = scmp.eq.s32.totalorder %s20, 1
      %p101 = por %p99, %p100
      %p102 = scmp.ne.s32.totalorder %s93, %s94
      %p103 = scmp.eq.s32.totalorder %s20, 0
      %p104 = por %p102, %p103
      %p105 = scmp.ne.s32.totalorder %s93, %s94
      %p106 = scmp.eq.s32.totalorder %s21, 1
      %p107 = por %p105, %p106
      %p109 = scmp.ne.s32.totalorder %s94, %s108
      %p110 = scmp.eq.s32.totalorder %s21, 0
      %p111 = por %p109, %p110
      %s113 = sadd.s32 %s112, 1
      %p116 = scmp.eq.s32.totalorder %s15, 1
      %p117 = scmp.ne.s32.totalorder %s112, %s114
      %p118 = scmp.eq.s32.totalorder %s15, 0
      %p119 = por %p117, %p118
      %p120 = scmp.ne.s32.totalorder %s112, %s114
      %p121 = scmp.eq.s32.totalorder %s20, 1
      %p122 = por %p120, %p121
      %p123 = scmp.ne.s32.totalorder %s114, %s115
      %p124 = scmp.eq.s32.totalorder %s20, 0
      %p125 = por %p123, %p124
      %p126 = scmp.ne.s32.totalorder %s114, %s115
      %p127 = scmp.eq.s32.totalorder %s21, 1
      %p128 = por %p126, %p127
      %p130 = scmp.ne.s32.totalorder %s115, %s129
      %p131 = scmp.eq.s32.totalorder %s21, 0
      %p132 = por %p130, %p131
      %s133 = ssub.s32 %s15, %s22
      %p134 = scmp.eq.s32.totalorder %s133, 0
      %s136 = sadd.s32 %s135, 1
      %s137 = scalar_select %p134, %s135, %s136
      %p140 = pneg %p134
      %p141 = scmp.eq.s32.totalorder %s15, 1
      %p142 = por %p140, %p141
      %p143 = scmp.ne.s32.totalorder %s135, %s138
      %p144 = scmp.eq.s32.totalorder %s15, 0
      %p145 = por %p143, %p144
      %p146 = scmp.ne.s32.totalorder %s135, %s138
      %p147 = scmp.eq.s32.totalorder %s20, 1
      %p148 = por %p146, %p147
      %p149 = scmp.ne.s32.totalorder %s138, %s139
      %p150 = scmp.eq.s32.totalorder %s20, 0
      %p151 = por %p149, %p150
      %p152 = scmp.ne.s32.totalorder %s138, %s139
      %p153 = scmp.eq.s32.totalorder %s21, 1
      %p154 = por %p152, %p153
      %p156 = scmp.ne.s32.totalorder %s139, %s155
      %p157 = scmp.eq.s32.totalorder %s21, 0
      %p158 = por %p156, %p157
      %p159 = scmp.le.s32.totalorder 1, %s15
      %p160 = scmp.lt.s32.totalorder %s15, 3
      %p161 = pnand %p159, %p160
      %p162 = pneg %p161
      // Predicated region
      $region9: #{tpu_custom_call.1} parent=5 // pred_check
        _
      $region10: #{tpu_custom_call.1} parent=5 // pred_check_branch
        %164 = sbr.rel (%p161) target = $region12
      $region11: #{tpu_custom_call.1} parent=5 // pred_region
        %s165 = ssub.s32 %s15, 1
        // Predicated region
        $region13: #{tpu_custom_call.1} parent=11 // pred_check
          %p166 = pneg %p62
        $region14: #{tpu_custom_call.1} parent=11 // pred_check_branch
          %168 = sbr.rel (%p166) target = $region16
        $region15: #{tpu_custom_call.1} parent=11 // pred_region
          _
        $region16: #{tpu_custom_call.1} parent=11 // pred_fallthru
          _
        // Predicated region
        $region17: #{tpu_custom_call.1} parent=11 // pred_check
          %p169 = pneg %p83
        $region18: #{tpu_custom_call.1} parent=11 // pred_check_branch
          %171 = sbr.rel (%p169) target = $region20
        $region19: #{tpu_custom_call.1} parent=11 // pred_region
          _
        $region20: #{tpu_custom_call.1} parent=11 // pred_fallthru
          _
        // Predicated region
        $region21: #{tpu_custom_call.1} parent=11 // pred_check
          %p172 = pneg %p104
        $region22: #{tpu_custom_call.1} parent=11 // pred_check_branch
          %174 = sbr.rel (%p172) target = $region24
        $region23: #{tpu_custom_call.1} parent=11 // pred_region
          %s176 = ssub.s32 14336, 14336
          %177 = vsyncadd [#allocation3], %s176
          %s178 = sshll.u32 [#allocation2], 4
          %s179 = int_to_ptr.vmem [resolvable:$true] %s178
          %184 = dma.hbm_to_vmem [thread:$0]  %s3, 14336, %s179, [#allocation3], 448, 448, 28
        $region24: #{tpu_custom_call.1} parent=11 // pred_fallthru
          _
        // Predicated region
        $region25: #{tpu_custom_call.1} parent=11 // pred_check
          %p185 = pneg %p125
        $region26: #{tpu_custom_call.1} parent=11 // pred_check_branch
          %187 = sbr.rel (%p185) target = $region28
        $region27: #{tpu_custom_call.1} parent=11 // pred_region
          _
        $region28: #{tpu_custom_call.1} parent=11 // pred_fallthru
          _
      $region12: #{tpu_custom_call.1} parent=5 // pred_fallthru
        _
      %p188 = scmp.lt.s32.totalorder %s15, 2
      // Predicated region
      $region29: #{tpu_custom_call.1} parent=5 // pred_check
        %p189 = pneg %p188
      $region30: #{tpu_custom_call.1} parent=5 // pred_check_branch
        %191 = sbr.rel (%p189) target = $region32
      $region31: #{tpu_custom_call.1} parent=5 // pred_region
        // Predicated region
        $region33: #{tpu_custom_call.1} parent=31 // pred_check
          %p192 = pneg %p35
        $region34: #{tpu_custom_call.1} parent=31 // pred_check_branch
          %194 = sbr.rel (%p192) target = $region36
        $region35: #{tpu_custom_call.1} parent=31 // pred_region
          %s195 = smul.u32 16, %s15
          %p196 = scmp.lt.s32.totalorder %s195, 31
          %s197 = scalar_select %p196, %s195, 31
          %s198 = smul.addr %s197, 8
          %s199 = scalar_lea.vmem %s0, %s198
          %s200 = smul.u32 16, %s15
        $region36: #{tpu_custom_call.1} parent=31 // pred_fallthru
          _
      $region32: #{tpu_custom_call.1} parent=5 // pred_fallthru
        _
      %p201 = scmp.le.s32.totalorder 1, %s15
      %p202 = scmp.lt.s32.totalorder %s15, 3
      %p203 = pnand %p201, %p202
      %p204 = pneg %p203
      // Predicated region
      $region37: #{tpu_custom_call.1} parent=5 // pred_check
        _
      $region38: #{tpu_custom_call.1} parent=5 // pred_check_branch
        %206 = sbr.rel (%p203) target = $region40
      $region39: #{tpu_custom_call.1} parent=5 // pred_region
        %s207 = ssub.s32 %s15, 1
        // Predicated region
        $region41: #{tpu_custom_call.1} parent=39 // pred_check
          %p208 = pneg %p104
        $region42: #{tpu_custom_call.1} parent=39 // pred_check_branch
          %210 = sbr.rel (%p208) target = $region44
        $region43: #{tpu_custom_call.1} parent=39 // pred_region
          %211 = dma.done [#allocation3], 14336
        $region44: #{tpu_custom_call.1} parent=39 // pred_fallthru
          _
        %s212 = smul.u32 16, %s20
        %p213 = scmp.lt.s32.totalorder %s212, 31
        %s214 = scalar_select %p213, %s212, 31
        %s215 = smul.addr %s214, 8
        %s216 = scalar_lea.vmem %s0, %s215
        %p217 = pneg %p41
        %p218 = pneg %p38
        %p219 = pneg %p62
        %p220 = pneg %p59
        %p221 = pneg %p83
        %p222 = pneg %p80
        %p223 = pneg %p104
        %p224 = pneg %p101
        %p225 = pneg %p125
        %p226 = pneg %p122
        %p227 = pneg %p151
        %p228 = pneg %p148
        %s229 = sand.u32 %s138, 1
        %s230 = scalar_lea.sflag [#allocation4], %s229
        %s231 = sand.u32 %s138, 1
        %s232 = smul.addr %s231, 896
        %s233 = scalar_lea.vmem [#allocation5], %s232
        %s234 = smul.u32 16, %s20
        %p235 = scmp.lt.s32.totalorder %s234, 31
        %s236 = scalar_select %p235, %s234, 31
        %s237 = smul.addr %s236, 8
        %s238 = scalar_lea.vmem %s0, %s237
        %s239 = smul.u32 16, %s20
        %s240 = smul.u32 16, %s20
        %v242 = vld [vmem:[%s238] sm:$0xff]
        %v243 = vld [vmem:[%s238 + $0x8] sm:$0xff]
        %v244 = vld [vmem:[%s238 + $0x10] sm:$0xff]
        %v245 = vld [vmem:[%s238 + $0x18] sm:$0xff]
        %v246 = vld [vmem:[%s238 + $0x20] sm:$0xff]
        %v247 = vld [vmem:[%s238 + $0x28] sm:$0xff]
        %v248 = vld [vmem:[%s238 + $0x30] sm:$0xff]
        %v249 = vld [vmem:[%s238 + $0x38] sm:$0xff]
        %v250 = vld [vmem:[%s238 + $0x40] sm:$0xff]
        %v251 = vld [vmem:[%s238 + $0x48] sm:$0xff]
        %v252 = vld [vmem:[%s238 + $0x50] sm:$0xff]
        %v253 = vld [vmem:[%s238 + $0x58] sm:$0xff]
        %v254 = vld [vmem:[%s238 + $0x60] sm:$0xff]
        %v255 = vld [vmem:[%s238 + $0x68] sm:$0xff]
        %v256 = vld [vmem:[%s238 + $0x70] sm:$0xff]
        %v257 = vld [vmem:[%s238 + $0x78] sm:$0xff]
        %v258 = vpack.c.bf16 %v243, %v242
        %v259 = vpack.c.bf16 %v245, %v244
        %v260 = vpack.c.bf16 %v247, %v246
        %v261 = vpack.c.bf16 %v249, %v248
        %v262 = vpack.c.bf16 %v251, %v250
        %v263 = vpack.c.bf16 %v253, %v252
        %v264 = vpack.c.bf16 %v255, %v254
        %v265 = vpack.c.bf16 %v257, %v256
        %v266 = vld [vmem:[%s1] sm:$0xff]
        %v267 = vld [vmem:[%s1 + $0x8] sm:$0xff]
        %v268 = vld [vmem:[%s1 + $0x10] sm:$0xff]
        %v269 = vld [vmem:[%s1 + $0x18] sm:$0xff]
        %v270 = vld [vmem:[%s1 + $0x20] sm:$0xff]
        %v271 = vld [vmem:[%s1 + $0x28] sm:$0xff]
        %v272 = vld [vmem:[%s1 + $0x30] sm:$0xff]
        %v273 = vld [vmem:[%s1 + $0x38] sm:$0xff]
        %v274 = vld [vmem:[%s2] sm:$0x3]
        %v276 = vlaneseq
        %v277 = vshrl.u32 %v276, 7
        %v278 = vsub.s32 0, %v277
        %v279 = vrot.slane %v274, %v278
        %v280 = vlaneseq
        %v281 = vshrl.u32 %v280, 7
        %v282 = vsub.s32 1, %v281
        %v283 = vrot.slane %v274, %v282
        %v294 = vunpack.c.l.b16 %v266
        %v295 = vunpack.c.h.b16 %v266
        %v296 = vunpack.c.l.b16 %v267
        %v297 = vunpack.c.h.b16 %v267
        %v298 = vunpack.c.l.b16 %v268
        %v299 = vunpack.c.h.b16 %v268
        %v300 = vunpack.c.l.b16 %v269
        %v301 = vunpack.c.h.b16 %v269
        %v302 = vunpack.c.l.b16 %v270
        %v303 = vunpack.c.h.b16 %v270
        %v304 = vunpack.c.l.b16 %v271
        %v305 = vunpack.c.h.b16 %v271
        %v306 = vunpack.c.l.b16 %v272
        %v307 = vunpack.c.h.b16 %v272
        %v308 = vunpack.c.l.b16 %v273
        %v309 = vunpack.c.h.b16 %v273
        %v310 = vpack.c.b16 %v296, %v294
        %v311 = vpack.c.b16 %v297, %v295
        %v312 = vpack.c.b16 %v300, %v298
        %v313 = vpack.c.b16 %v301, %v299
        %v314 = vpack.c.b16 %v304, %v302
        %v315 = vpack.c.b16 %v305, %v303
        %v316 = vpack.c.b16 %v308, %v306
        %v317 = vpack.c.b16 %v309, %v307
        %vm326 = vcmask 523264
        %v328 = vsel %vm326, %v258, 0
        %v331 = vsel %vm326, %v259, 0
        %v334 = vsel %vm326, %v260, 0
        %v337 = vsel %vm326, %v261, 0
        %v340 = vsel %vm326, %v262, 0
        %v343 = vsel %vm326, %v263, 0
        %v346 = vsel %vm326, %v264, 0
        %v349 = vsel %vm326, %v265, 0
        %351 = vmatprep.subr.bf16.mxu0 %v311
        %352 = vmatpush1.bf16.msra.mxu0 %v310
        %353 = vmatprep.subr.bf16.mxu0 %v313
        %354 = vmatpush1.bf16.msra.mxu0 %v312
        %355 = vmatprep.subr.bf16.mxu0 %v315
        %356 = vmatpush1.bf16.msra.mxu0 %v314
        %357 = vmatprep.subr.bf16.mxu0 %v317
        %358 = vmatpush1.bf16.msra.mxu0 %v316
        %359 = vmatprep.subr.bf16.mxu0 0
        %360 = vmatpush1.bf16.msra.mxu0 0
        %361 = vmatprep.subr.bf16.mxu0 0
        %362 = vmatpush1.bf16.msra.mxu0 0
        %363 = vmatprep.subr.bf16.mxu0 0
        %364 = vmatpush1.bf16.msra.mxu0 0
        %365 = vmatprep.subr.bf16.mxu0 0
        %366 = vmatpush1.bf16.msra.mxu0 0
        %367 = vmatprep.subr.bf16.mxu0 0
        %368 = vmatpush1.bf16.msra.mxu0 0
        %369 = vmatprep.subr.bf16.mxu0 0
        %370 = vmatpush1.bf16.msra.mxu0 0
        %371 = vmatprep.subr.bf16.mxu0 0
        %372 = vmatpush1.bf16.msra.mxu0 0
        %373 = vmatprep.subr.bf16.mxu0 0
        %374 = vmatpush1.bf16.msra.mxu0 0
        %375 = vmatprep.subr.bf16.mxu0 0
        %376 = vmatpush1.bf16.msra.mxu0 0
        %377 = vmatprep.subr.bf16.mxu0 0
        %378 = vmatpush1.bf16.msra.mxu0 0
        %379 = vmatprep.subr.bf16.mxu0 0
        %380 = vmatpush1.bf16.msra.mxu0 0
        %381 = vmatprep.subr.bf16.mxu0 0
        %382 = vmatpush1.bf16.msra.mxu0 0
        %383 = vmatprep.mubr.bf16.mxu0 0
        %384 = vmatmul.mubr.bf16.gmra.mrb[0].mxu0 %v328
        %v385 = vpop.f32.mrb[0].mxu0
        %v386 = vadd.f32 %v279, %v385
        %v387 = vpop.f32.mrb[0].mxu0
        %v388 = vadd.f32 %v283, %v387
        %v389 = vpop.f32.mrb[0].mxu0
        %v390 = vadd.f32 %v279, %v389
        %v391 = vpop.f32.mrb[0].mxu0
        %v392 = vadd.f32 %v283, %v391
        %393 = vmatprep.mubr.bf16.mxu0 0
        %394 = vmatmul.mubr.bf16.gmra.mrb[0].mxu0 %v331
        %v395 = vpop.f32.mrb[0].mxu0
        %v396 = vadd.f32 %v279, %v395
        %v397 = vpop.f32.mrb[0].mxu0
        %v398 = vadd.f32 %v283, %v397
        %v399 = vpop.f32.mrb[0].mxu0
        %v400 = vadd.f32 %v279, %v399
        %v401 = vpop.f32.mrb[0].mxu0
        %v402 = vadd.f32 %v283, %v401
        %403 = vmatprep.mubr.bf16.mxu0 0
        %404 = vmatmul.mubr.bf16.gmra.mrb[0].mxu0 %v334
        %v405 = vpop.f32.mrb[0].mxu0
        %v406 = vadd.f32 %v279, %v405
        %v407 = vpop.f32.mrb[0].mxu0
        %v408 = vadd.f32 %v283, %v407
        %v409 = vpop.f32.mrb[0].mxu0
        %v410 = vadd.f32 %v279, %v409
        %v411 = vpop.f32.mrb[0].mxu0
        %v412 = vadd.f32 %v283, %v411
        %413 = vmatprep.mubr.bf16.mxu0 0
        %414 = vmatmul.mubr.bf16.gmra.mrb[0].mxu0 %v337
        %v415 = vpop.f32.mrb[0].mxu0
        %v416 = vadd.f32 %v279, %v415
        %v417 = vpop.f32.mrb[0].mxu0
        %v418 = vadd.f32 %v283, %v417
        %v419 = vpop.f32.mrb[0].mxu0
        %v420 = vadd.f32 %v279, %v419
        %v421 = vpop.f32.mrb[0].mxu0
        %v422 = vadd.f32 %v283, %v421
        %423 = vmatprep.mubr.bf16.mxu0 0
        %424 = vmatmul.mubr.bf16.gmra.mrb[0].mxu0 %v340
        %v425 = vpop.f32.mrb[0].mxu0
        %v426 = vadd.f32 %v279, %v425
        %v427 = vpop.f32.mrb[0].mxu0
        %v428 = vadd.f32 %v283, %v427
        %v429 = vpop.f32.mrb[0].mxu0
        %v430 = vadd.f32 %v279, %v429
        %v431 = vpop.f32.mrb[0].mxu0
        %v432 = vadd.f32 %v283, %v431
        %433 = vmatprep.mubr.bf16.mxu0 0
        %434 = vmatmul.mubr.bf16.gmra.mrb[0].mxu0 %v343
        %v435 = vpop.f32.mrb[0].mxu0
        %v436 = vadd.f32 %v279, %v435
        %v437 = vpop.f32.mrb[0].mxu0
        %v438 = vadd.f32 %v283, %v437
        %v439 = vpop.f32.mrb[0].mxu0
        %v440 = vadd.f32 %v279, %v439
        %v441 = vpop.f32.mrb[0].mxu0
        %v442 = vadd.f32 %v283, %v441
        %443 = vmatprep.mubr.bf16.mxu0 0
        %444 = vmatmul.mubr.bf16.gmra.mrb[0].mxu0 %v346
        %v445 = vpop.f32.mrb[0].mxu0
        %v446 = vadd.f32 %v279, %v445
        %v447 = vpop.f32.mrb[0].mxu0
        %v448 = vadd.f32 %v283, %v447
        %v449 = vpop.f32.mrb[0].mxu0
        %v450 = vadd.f32 %v279, %v449
        %v451 = vpop.f32.mrb[0].mxu0
        %v452 = vadd.f32 %v283, %v451
        %453 = vmatprep.mubr.bf16.mxu0 0
        %454 = vmatmul.mubr.bf16.gmra.mrb[0].mxu0 %v349
        %v455 = vpop.f32.mrb[0].mxu0
        %v456 = vadd.f32 %v279, %v455
        %v457 = vpop.f32.mrb[0].mxu0
        %v458 = vadd.f32 %v283, %v457
        %v459 = vpop.f32.mrb[0].mxu0
        %v460 = vadd.f32 %v279, %v459
        %v461 = vpop.f32.mrb[0].mxu0
        %v462 = vadd.f32 %v283, %v461
        %463 = vdwg.mxu0
        %vm464 = vcmp.ge.f32.partialorder %v386, 0.0
        %vm465 = vcmp.ge.f32.partialorder %v388, 0.0
        %vm466 = vcmp.ge.f32.partialorder %v390, 0.0
        %vm467 = vcmp.ge.f32.partialorder %v392, 0.0
        %vm468 = vcmp.ge.f32.partialorder %v396, 0.0
        %vm469 = vcmp.ge.f32.partialorder %v398, 0.0
        %vm470 = vcmp.ge.f32.partialorder %v400, 0.0
        %vm471 = vcmp.ge.f32.partialorder %v402, 0.0
        %vm472 = vcmp.ge.f32.partialorder %v406, 0.0
        %vm473 = vcmp.ge.f32.partialorder %v408, 0.0
        %vm474 = vcmp.ge.f32.partialorder %v410, 0.0
        %vm475 = vcmp.ge.f32.partialorder %v412, 0.0
        %vm476 = vcmp.ge.f32.partialorder %v416, 0.0
        %vm477 = vcmp.ge.f32.partialorder %v418, 0.0
        %vm478 = vcmp.ge.f32.partialorder %v420, 0.0
        %vm479 = vcmp.ge.f32.partialorder %v422, 0.0
        %vm480 = vcmp.ge.f32.partialorder %v426, 0.0
        %vm481 = vcmp.ge.f32.partialorder %v428, 0.0
        %vm482 = vcmp.ge.f32.partialorder %v430, 0.0
        %vm483 = vcmp.ge.f32.partialorder %v432, 0.0
        %vm484 = vcmp.ge.f32.partialorder %v436, 0.0
        %vm485 = vcmp.ge.f32.partialorder %v438, 0.0
        %vm486 = vcmp.ge.f32.partialorder %v440, 0.0
        %vm487 = vcmp.ge.f32.partialorder %v442, 0.0
        %vm488 = vcmp.ge.f32.partialorder %v446, 0.0
        %vm489 = vcmp.ge.f32.partialorder %v448, 0.0
        %vm490 = vcmp.ge.f32.partialorder %v450, 0.0
        %vm491 = vcmp.ge.f32.partialorder %v452, 0.0
        %vm492 = vcmp.ge.f32.partialorder %v456, 0.0
        %vm493 = vcmp.ge.f32.partialorder %v458, 0.0
        %vm494 = vcmp.ge.f32.partialorder %v460, 0.0
        %vm495 = vcmp.ge.f32.partialorder %v462, 0.0
        %v496 = vmul.f32 %v386, 0.01
        %v497 = vmul.f32 %v388, 0.01
        %v498 = vmul.f32 %v390, 0.01
        %v499 = vmul.f32 %v392, 0.01
        %v500 = vmul.f32 %v396, 0.01
        %v501 = vmul.f32 %v398, 0.01
        %v502 = vmul.f32 %v400, 0.01
        %v503 = vmul.f32 %v402, 0.01
        %v504 = vmul.f32 %v406, 0.01
        %v505 = vmul.f32 %v408, 0.01
        %v506 = vmul.f32 %v410, 0.01
        %v507 = vmul.f32 %v412, 0.01
        %v508 = vmul.f32 %v416, 0.01
        %v509 = vmul.f32 %v418, 0.01
        %v510 = vmul.f32 %v420, 0.01
        %v511 = vmul.f32 %v422, 0.01
        %v512 = vmul.f32 %v426, 0.01
        %v513 = vmul.f32 %v428, 0.01
        %v514 = vmul.f32 %v430, 0.01
        %v515 = vmul.f32 %v432, 0.01
        %v516 = vmul.f32 %v436, 0.01
        %v517 = vmul.f32 %v438, 0.01
        %v518 = vmul.f32 %v440, 0.01
        %v519 = vmul.f32 %v442, 0.01
        %v520 = vmul.f32 %v446, 0.01
        %v521 = vmul.f32 %v448, 0.01
        %v522 = vmul.f32 %v450, 0.01
        %v523 = vmul.f32 %v452, 0.01
        %v524 = vmul.f32 %v456, 0.01
        %v525 = vmul.f32 %v458, 0.01
        %v526 = vmul.f32 %v460, 0.01
        %v527 = vmul.f32 %v462, 0.01
        %v528 = vsel %vm464, %v386, %v496
        %v529 = vsel %vm465, %v388, %v497
        %v530 = vsel %vm466, %v390, %v498
        %v531 = vsel %vm467, %v392, %v499
        %v532 = vsel %vm468, %v396, %v500
        %v533 = vsel %vm469, %v398, %v501
        %v534 = vsel %vm470, %v400, %v502
        %v535 = vsel %vm471, %v402, %v503
        %v536 = vsel %vm472, %v406, %v504
        %v537 = vsel %vm473, %v408, %v505
        %v538 = vsel %vm474, %v410, %v506
        %v539 = vsel %vm475, %v412, %v507
        %v540 = vsel %vm476, %v416, %v508
        %v541 = vsel %vm477, %v418, %v509
        %v542 = vsel %vm478, %v420, %v510
        %v543 = vsel %vm479, %v422, %v511
        %v544 = vsel %vm480, %v426, %v512
        %v545 = vsel %vm481, %v428, %v513
        %v546 = vsel %vm482, %v430, %v514
        %v547 = vsel %vm483, %v432, %v515
        %v548 = vsel %vm484, %v436, %v516
        %v549 = vsel %vm485, %v438, %v517
        %v550 = vsel %vm486, %v440, %v518
        %v551 = vsel %vm487, %v442, %v519
        %v552 = vsel %vm488, %v446, %v520
        %v553 = vsel %vm489, %v448, %v521
        %v554 = vsel %vm490, %v450, %v522
        %v555 = vsel %vm491, %v452, %v523
        %v556 = vsel %vm492, %v456, %v524
        %v557 = vsel %vm493, %v458, %v525
        %v558 = vsel %vm494, %v460, %v526
        %v559 = vsel %vm495, %v462, %v527
        %v560 = vpack.c.bf16 %v530, %v528
        %v561 = vpack.c.bf16 %v531, %v529
        %v562 = vpack.c.bf16 %v534, %v532
        %v563 = vpack.c.bf16 %v535, %v533
        %v564 = vpack.c.bf16 %v538, %v536
        %v565 = vpack.c.bf16 %v539, %v537
        %v566 = vpack.c.bf16 %v542, %v540
        %v567 = vpack.c.bf16 %v543, %v541
        %v568 = vpack.c.bf16 %v546, %v544
        %v569 = vpack.c.bf16 %v547, %v545
        %v570 = vpack.c.bf16 %v550, %v548
        %v571 = vpack.c.bf16 %v551, %v549
        %v572 = vpack.c.bf16 %v554, %v552
        %v573 = vpack.c.bf16 %v555, %v553
        %v574 = vpack.c.bf16 %v558, %v556
        %v575 = vpack.c.bf16 %v559, %v557
        %v576 = vld [vmem:[#allocation2] sm:$0xff]
        %v577 = vld [vmem:[#allocation2 + $0x8] sm:$0xff]
        %v578 = vld [vmem:[#allocation2 + $0x10] sm:$0xff]
        %v579 = vld [vmem:[#allocation2 + $0x18] sm:$0xf]
        %v580 = vld [vmem:[#allocation2 + $0x1c] sm:$0xff]
        %v581 = vld [vmem:[#allocation2 + $0x24] sm:$0xff]
        %v582 = vld [vmem:[#allocation2 + $0x2c] sm:$0xff]
        %v583 = vld [vmem:[#allocation2 + $0x34] sm:$0xf]
        %v584 = vld [vmem:[#allocation2 + $0x38] sm:$0xff]
        %v585 = vld [vmem:[#allocation2 + $0x40] sm:$0xff]
        %v586 = vld [vmem:[#allocation2 + $0x48] sm:$0xff]
        %v587 = vld [vmem:[#allocation2 + $0x50] sm:$0xf]
        %v588 = vld [vmem:[#allocation2 + $0x54] sm:$0xff]
        %v589 = vld [vmem:[#allocation2 + $0x5c] sm:$0xff]
        %v590 = vld [vmem:[#allocation2 + $0x64] sm:$0xff]
        %v591 = vld [vmem:[#allocation2 + $0x6c] sm:$0xf]
        %v592 = vld [vmem:[#allocation2 + $0x70] sm:$0xff]
        %v593 = vld [vmem:[#allocation2 + $0x78] sm:$0xff]
        %v594 = vld [vmem:[#allocation2 + $0x80] sm:$0xff]
        %v595 = vld [vmem:[#allocation2 + $0x88] sm:$0xf]
        %v596 = vld [vmem:[#allocation2 + $0x8c] sm:$0xff]
        %v597 = vld [vmem:[#allocation2 + $0x94] sm:$0xff]
        %v598 = vld [vmem:[#allocation2 + $0x9c] sm:$0xff]
        %v599 = vld [vmem:[#allocation2 + $0xa4] sm:$0xf]
        %v600 = vld [vmem:[#allocation2 + $0xa8] sm:$0xff]
        %v601 = vld [vmem:[#allocation2 + $0xb0] sm:$0xff]
        %v602 = vld [vmem:[#allocation2 + $0xb8] sm:$0xff]
        %v603 = vld [vmem:[#allocation2 + $0xc0] sm:$0xf]
        %v604 = vld [vmem:[#allocation2 + $0xc4] sm:$0xff]
        %v605 = vld [vmem:[#allocation2 + $0xcc] sm:$0xff]
        %v606 = vld [vmem:[#allocation2 + $0xd4] sm:$0xff]
        %v607 = vld [vmem:[#allocation2 + $0xdc] sm:$0xf]
        %v608 = vld [vmem:[#allocation2 + $0xe0] sm:$0xff]
        %v609 = vld [vmem:[#allocation2 + $0xe8] sm:$0xff]
        %v610 = vld [vmem:[#allocation2 + $0xf0] sm:$0xff]
        %v611 = vld [vmem:[#allocation2 + $0xf8] sm:$0xf]
        %v612 = vld [vmem:[#allocation2 + $0xfc] sm:$0xff]
        %v613 = vld [vmem:[#allocation2 + $0x104] sm:$0xff]
        %v614 = vld [vmem:[#allocation2 + $0x10c] sm:$0xff]
        %v615 = vld [vmem:[#allocation2 + $0x114] sm:$0xf]
        %v616 = vld [vmem:[#allocation2 + $0x118] sm:$0xff]
        %v617 = vld [vmem:[#allocation2 + $0x120] sm:$0xff]
        %v618 = vld [vmem:[#allocation2 + $0x128] sm:$0xff]
        %v619 = vld [vmem:[#allocation2 + $0x130] sm:$0xf]
        %v620 = vld [vmem:[#allocation2 + $0x134] sm:$0xff]
        %v621 = vld [vmem:[#allocation2 + $0x13c] sm:$0xff]
        %v622 = vld [vmem:[#allocation2 + $0x144] sm:$0xff]
        %v623 = vld [vmem:[#allocation2 + $0x14c] sm:$0xf]
        %v624 = vld [vmem:[#allocation2 + $0x150] sm:$0xff]
        %v625 = vld [vmem:[#allocation2 + $0x158] sm:$0xff]
        %v626 = vld [vmem:[#allocation2 + $0x160] sm:$0xff]
        %v627 = vld [vmem:[#allocation2 + $0x168] sm:$0xf]
        %v628 = vld [vmem:[#allocation2 + $0x16c] sm:$0xff]
        %v629 = vld [vmem:[#allocation2 + $0x174] sm:$0xff]
        %v630 = vld [vmem:[#allocation2 + $0x17c] sm:$0xff]
        %v631 = vld [vmem:[#allocation2 + $0x184] sm:$0xf]
        %v632 = vld [vmem:[#allocation2 + $0x188] sm:$0xff]
        %v633 = vld [vmem:[#allocation2 + $0x190] sm:$0xff]
        %v634 = vld [vmem:[#allocation2 + $0x198] sm:$0xff]
        %v635 = vld [vmem:[#allocation2 + $0x1a0] sm:$0xf]
        %v636 = vld [vmem:[#allocation2 + $0x1a4] sm:$0xff]
        %v637 = vld [vmem:[#allocation2 + $0x1ac] sm:$0xff]
        %v638 = vld [vmem:[#allocation2 + $0x1b4] sm:$0xff]
        %v639 = vld [vmem:[#allocation2 + $0x1bc] sm:$0xf]
        %v640 = vld [vmem:[#allocation2 + $0x1c0] sm:$0xff]
        %v641 = vld [vmem:[#allocation2 + $0x1c8] sm:$0xff]
        %v642 = vld [vmem:[#allocation2 + $0x1d0] sm:$0xff]
        %v643 = vld [vmem:[#allocation2 + $0x1d8] sm:$0xf]
        %v644 = vld [vmem:[#allocation2 + $0x1dc] sm:$0xff]
        %v645 = vld [vmem:[#allocation2 + $0x1e4] sm:$0xff]
        %v646 = vld [vmem:[#allocation2 + $0x1ec] sm:$0xff]
        %v647 = vld [vmem:[#allocation2 + $0x1f4] sm:$0xf]
        %v648 = vld [vmem:[#allocation2 + $0x1f8] sm:$0xff]
        %v649 = vld [vmem:[#allocation2 + $0x200] sm:$0xff]
        %v650 = vld [vmem:[#allocation2 + $0x208] sm:$0xff]
        %v651 = vld [vmem:[#allocation2 + $0x210] sm:$0xf]
        %v652 = vld [vmem:[#allocation2 + $0x214] sm:$0xff]
        %v653 = vld [vmem:[#allocation2 + $0x21c] sm:$0xff]
        %v654 = vld [vmem:[#allocation2 + $0x224] sm:$0xff]
        %v655 = vld [vmem:[#allocation2 + $0x22c] sm:$0xf]
        %v656 = vld [vmem:[#allocation2 + $0x230] sm:$0xff]
        %v657 = vld [vmem:[#allocation2 + $0x238] sm:$0xff]
        %v658 = vld [vmem:[#allocation2 + $0x240] sm:$0xff]
        %v659 = vld [vmem:[#allocation2 + $0x248] sm:$0xf]
        %v660 = vld [vmem:[#allocation2 + $0x24c] sm:$0xff]
        %v661 = vld [vmem:[#allocation2 + $0x254] sm:$0xff]
        %v662 = vld [vmem:[#allocation2 + $0x25c] sm:$0xff]
        %v663 = vld [vmem:[#allocation2 + $0x264] sm:$0xf]
        %v664 = vld [vmem:[#allocation2 + $0x268] sm:$0xff]
        %v665 = vld [vmem:[#allocation2 + $0x270] sm:$0xff]
        %v666 = vld [vmem:[#allocation2 + $0x278] sm:$0xff]
        %v667 = vld [vmem:[#allocation2 + $0x280] sm:$0xf]
        %v668 = vld [vmem:[#allocation2 + $0x284] sm:$0xff]
        %v669 = vld [vmem:[#allocation2 + $0x28c] sm:$0xff]
        %v670 = vld [vmem:[#allocation2 + $0x294] sm:$0xff]
        %v671 = vld [vmem:[#allocation2 + $0x29c] sm:$0xf]
        %v672 = vld [vmem:[#allocation2 + $0x2a0] sm:$0xff]
        %v673 = vld [vmem:[#allocation2 + $0x2a8] sm:$0xff]
        %v674 = vld [vmem:[#allocation2 + $0x2b0] sm:$0xff]
        %v675 = vld [vmem:[#allocation2 + $0x2b8] sm:$0xf]
        %v676 = vld [vmem:[#allocation2 + $0x2bc] sm:$0xff]
        %v677 = vld [vmem:[#allocation2 + $0x2c4] sm:$0xff]
        %v678 = vld [vmem:[#allocation2 + $0x2cc] sm:$0xff]
        %v679 = vld [vmem:[#allocation2 + $0x2d4] sm:$0xf]
        %v680 = vld [vmem:[#allocation2 + $0x2d8] sm:$0xff]
        %v681 = vld [vmem:[#allocation2 + $0x2e0] sm:$0xff]
        %v682 = vld [vmem:[#allocation2 + $0x2e8] sm:$0xff]
        %v683 = vld [vmem:[#allocation2 + $0x2f0] sm:$0xf]
        %v684 = vld [vmem:[#allocation2 + $0x2f4] sm:$0xff]
        %v685 = vld [vmem:[#allocation2 + $0x2fc] sm:$0xff]
        %v686 = vld [vmem:[#allocation2 + $0x304] sm:$0xff]
        %v687 = vld [vmem:[#allocation2 + $0x30c] sm:$0xf]
        %v688 = vld [vmem:[#allocation2 + $0x310] sm:$0xff]
        %v689 = vld [vmem:[#allocation2 + $0x318] sm:$0xff]
        %v690 = vld [vmem:[#allocation2 + $0x320] sm:$0xff]
        %v691 = vld [vmem:[#allocation2 + $0x328] sm:$0xf]
        %v692 = vld [vmem:[#allocation2 + $0x32c] sm:$0xff]
        %v693 = vld [vmem:[#allocation2 + $0x334] sm:$0xff]
        %v694 = vld [vmem:[#allocation2 + $0x33c] sm:$0xff]
        %v695 = vld [vmem:[#allocation2 + $0x344] sm:$0xf]
        %v696 = vld [vmem:[#allocation2 + $0x348] sm:$0xff]
        %v697 = vld [vmem:[#allocation2 + $0x350] sm:$0xff]
        %v698 = vld [vmem:[#allocation2 + $0x358] sm:$0xff]
        %v699 = vld [vmem:[#allocation2 + $0x360] sm:$0xf]
        %v700 = vld [vmem:[#allocation2 + $0x364] sm:$0xff]
        %v701 = vld [vmem:[#allocation2 + $0x36c] sm:$0xff]
        %v702 = vld [vmem:[#allocation2 + $0x374] sm:$0xff]
        %v703 = vld [vmem:[#allocation2 + $0x37c] sm:$0xf]
        %v704 = vld [vmem:[%s4] sm:$0xff]
        %v706 = vlaneseq
        %v707 = vshrl.u32 %v706, 7
        %v708 = vsub.s32 0, %v707
        %v709 = vrot.slane %v704, %v708
        %v710 = vlaneseq
        %v711 = vshrl.u32 %v710, 7
        %v712 = vsub.s32 1, %v711
        %v713 = vrot.slane %v704, %v712
        %v714 = vlaneseq
        %v715 = vshrl.u32 %v714, 7
        %v716 = vsub.s32 2, %v715
        %v717 = vrot.slane %v704, %v716
        %v718 = vlaneseq
        %v719 = vshrl.u32 %v718, 7
        %v720 = vsub.s32 3, %v719
        %v721 = vrot.slane %v704, %v720
        %v722 = vlaneseq
        %v723 = vshrl.u32 %v722, 7
        %v724 = vsub.s32 4, %v723
        %v725 = vrot.slane %v704, %v724
        %v726 = vlaneseq
        %v727 = vshrl.u32 %v726, 7
        %v728 = vsub.s32 5, %v727
        %v729 = vrot.slane %v704, %v728
        %v730 = vlaneseq
        %v731 = vshrl.u32 %v730, 7
        %v732 = vsub.s32 6, %v731
        %v733 = vrot.slane %v704, %v732
        %v869 = vunpack.c.l.b16 %v576
        %v870 = vunpack.c.h.b16 %v576
        %v871 = vunpack.c.l.b16 %v577
        %v872 = vunpack.c.h.b16 %v577
        %v873 = vunpack.c.l.b16 %v578
        %v874 = vunpack.c.h.b16 %v578
        %v875 = vunpack.c.l.b16 %v579
        %v876 = vunpack.c.l.b16 %v580
        %v877 = vunpack.c.h.b16 %v580
        %v878 = vunpack.c.l.b16 %v581
        %v879 = vunpack.c.h.b16 %v581
        %v880 = vunpack.c.l.b16 %v582
        %v881 = vunpack.c.h.b16 %v582
        %v882 = vunpack.c.l.b16 %v583
        %v883 = vunpack.c.l.b16 %v584
        %v884 = vunpack.c.h.b16 %v584
        %v885 = vunpack.c.l.b16 %v585
        %v886 = vunpack.c.h.b16 %v585
        %v887 = vunpack.c.l.b16 %v586
        %v888 = vunpack.c.h.b16 %v586
        %v889 = vunpack.c.l.b16 %v587
        %v890 = vunpack.c.l.b16 %v588
        %v891 = vunpack.c.h.b16 %v588
        %v892 = vunpack.c.l.b16 %v589
        %v893 = vunpack.c.h.b16 %v589
        %v894 = vunpack.c.l.b16 %v590
        %v895 = vunpack.c.h.b16 %v590
        %v896 = vunpack.c.l.b16 %v591
        %v897 = vunpack.c.l.b16 %v592
        %v898 = vunpack.c.h.b16 %v592
        %v899 = vunpack.c.l.b16 %v593
        %v900 = vunpack.c.h.b16 %v593
        %v901 = vunpack.c.l.b16 %v594
        %v902 = vunpack.c.h.b16 %v594
        %v903 = vunpack.c.l.b16 %v595
        %v904 = vunpack.c.l.b16 %v596
        %v905 = vunpack.c.h.b16 %v596
        %v906 = vunpack.c.l.b16 %v597
        %v907 = vunpack.c.h.b16 %v597
        %v908 = vunpack.c.l.b16 %v598
        %v909 = vunpack.c.h.b16 %v598
        %v910 = vunpack.c.l.b16 %v599
        %v911 = vunpack.c.l.b16 %v600
        %v912 = vunpack.c.h.b16 %v600
        %v913 = vunpack.c.l.b16 %v601
        %v914 = vunpack.c.h.b16 %v601
        %v915 = vunpack.c.l.b16 %v602
        %v916 = vunpack.c.h.b16 %v602
        %v917 = vunpack.c.l.b16 %v603
        %v918 = vunpack.c.l.b16 %v604
        %v919 = vunpack.c.h.b16 %v604
        %v920 = vunpack.c.l.b16 %v605
        %v921 = vunpack.c.h.b16 %v605
        %v922 = vunpack.c.l.b16 %v606
        %v923 = vunpack.c.h.b16 %v606
        %v924 = vunpack.c.l.b16 %v607
        %v925 = vunpack.c.l.b16 %v608
        %v926 = vunpack.c.h.b16 %v608
        %v927 = vunpack.c.l.b16 %v609
        %v928 = vunpack.c.h.b16 %v609
        %v929 = vunpack.c.l.b16 %v610
        %v930 = vunpack.c.h.b16 %v610
        %v931 = vunpack.c.l.b16 %v611
        %v932 = vunpack.c.l.b16 %v612
        %v933 = vunpack.c.h.b16 %v612
        %v934 = vunpack.c.l.b16 %v613
        %v935 = vunpack.c.h.b16 %v613
        %v936 = vunpack.c.l.b16 %v614
        %v937 = vunpack.c.h.b16 %v614
        %v938 = vunpack.c.l.b16 %v615
        %v939 = vunpack.c.l.b16 %v616
        %v940 = vunpack.c.h.b16 %v616
        %v941 = vunpack.c.l.b16 %v617
        %v942 = vunpack.c.h.b16 %v617
        %v943 = vunpack.c.l.b16 %v618
        %v944 = vunpack.c.h.b16 %v618
        %v945 = vunpack.c.l.b16 %v619
        %v946 = vunpack.c.l.b16 %v620
        %v947 = vunpack.c.h.b16 %v620
        %v948 = vunpack.c.l.b16 %v621
        %v949 = vunpack.c.h.b16 %v621
        %v950 = vunpack.c.l.b16 %v622
        %v951 = vunpack.c.h.b16 %v622
        %v952 = vunpack.c.l.b16 %v623
        %v953 = vunpack.c.l.b16 %v624
        %v954 = vunpack.c.h.b16 %v624
        %v955 = vunpack.c.l.b16 %v625
        %v956 = vunpack.c.h.b16 %v625
        %v957 = vunpack.c.l.b16 %v626
        %v958 = vunpack.c.h.b16 %v626
        %v959 = vunpack.c.l.b16 %v627
        %v960 = vunpack.c.l.b16 %v628
        %v961 = vunpack.c.h.b16 %v628
        %v962 = vunpack.c.l.b16 %v629
        %v963 = vunpack.c.h.b16 %v629
        %v964 = vunpack.c.l.b16 %v630
        %v965 = vunpack.c.h.b16 %v630
        %v966 = vunpack.c.l.b16 %v631
        %v967 = vunpack.c.l.b16 %v632
        %v968 = vunpack.c.h.b16 %v632
        %v969 = vunpack.c.l.b16 %v633
        %v970 = vunpack.c.h.b16 %v633
        %v971 = vunpack.c.l.b16 %v634
        %v972 = vunpack.c.h.b16 %v634
        %v973 = vunpack.c.l.b16 %v635
        %v974 = vunpack.c.l.b16 %v636
        %v975 = vunpack.c.h.b16 %v636
        %v976 = vunpack.c.l.b16 %v637
        %v977 = vunpack.c.h.b16 %v637
        %v978 = vunpack.c.l.b16 %v638
        %v979 = vunpack.c.h.b16 %v638
        %v980 = vunpack.c.l.b16 %v639
        %v981 = vunpack.c.l.b16 %v640
        %v982 = vunpack.c.h.b16 %v640
        %v983 = vunpack.c.l.b16 %v641
        %v984 = vunpack.c.h.b16 %v641
        %v985 = vunpack.c.l.b16 %v642
        %v986 = vunpack.c.h.b16 %v642
        %v987 = vunpack.c.l.b16 %v643
        %v988 = vunpack.c.l.b16 %v644
        %v989 = vunpack.c.h.b16 %v644
        %v990 = vunpack.c.l.b16 %v645
        %v991 = vunpack.c.h.b16 %v645
        %v992 = vunpack.c.l.b16 %v646
        %v993 = vunpack.c.h.b16 %v646
        %v994 = vunpack.c.l.b16 %v647
        %v995 = vunpack.c.l.b16 %v648
        %v996 = vunpack.c.h.b16 %v648
        %v997 = vunpack.c.l.b16 %v649
        %v998 = vunpack.c.h.b16 %v649
        %v999 = vunpack.c.l.b16 %v650
        %v1000 = vunpack.c.h.b16 %v650
        %v1001 = vunpack.c.l.b16 %v651
        %v1002 = vunpack.c.l.b16 %v652
        %v1003 = vunpack.c.h.b16 %v652
        %v1004 = vunpack.c.l.b16 %v653
        %v1005 = vunpack.c.h.b16 %v653
        %v1006 = vunpack.c.l.b16 %v654
        %v1007 = vunpack.c.h.b16 %v654
        %v1008 = vunpack.c.l.b16 %v655
        %v1009 = vunpack.c.l.b16 %v656
        %v1010 = vunpack.c.h.b16 %v656
        %v1011 = vunpack.c.l.b16 %v657
        %v1012 = vunpack.c.h.b16 %v657
        %v1013 = vunpack.c.l.b16 %v658
        %v1014 = vunpack.c.h.b16 %v658
        %v1015 = vunpack.c.l.b16 %v659
        %v1016 = vunpack.c.l.b16 %v660
        %v1017 = vunpack.c.h.b16 %v660
        %v1018 = vunpack.c.l.b16 %v661
        %v1019 = vunpack.c.h.b16 %v661
        %v1020 = vunpack.c.l.b16 %v662
        %v1021 = vunpack.c.h.b16 %v662
        %v1022 = vunpack.c.l.b16 %v663
        %v1023 = vunpack.c.l.b16 %v664
        %v1024 = vunpack.c.h.b16 %v664
        %v1025 = vunpack.c.l.b16 %v665
        %v1026 = vunpack.c.h.b16 %v665
        %v1027 = vunpack.c.l.b16 %v666
        %v1028 = vunpack.c.h.b16 %v666
        %v1029 = vunpack.c.l.b16 %v667
        %v1030 = vunpack.c.l.b16 %v668
        %v1031 = vunpack.c.h.b16 %v668
        %v1032 = vunpack.c.l.b16 %v669
        %v1033 = vunpack.c.h.b16 %v669
        %v1034 = vunpack.c.l.b16 %v670
        %v1035 = vunpack.c.h.b16 %v670
        %v1036 = vunpack.c.l.b16 %v671
        %v1037 = vunpack.c.l.b16 %v672
        %v1038 = vunpack.c.h.b16 %v672
        %v1039 = vunpack.c.l.b16 %v673
        %v1040 = vunpack.c.h.b16 %v673
        %v1041 = vunpack.c.l.b16 %v674
        %v1042 = vunpack.c.h.b16 %v674
        %v1043 = vunpack.c.l.b16 %v675
        %v1044 = vunpack.c.l.b16 %v676
        %v1045 = vunpack.c.h.b16 %v676
        %v1046 = vunpack.c.l.b16 %v677
        %v1047 = vunpack.c.h.b16 %v677
        %v1048 = vunpack.c.l.b16 %v678
        %v1049 = vunpack.c.h.b16 %v678
        %v1050 = vunpack.c.l.b16 %v679
        %v1051 = vunpack.c.l.b16 %v680
        %v1052 = vunpack.c.h.b16 %v680
        %v1053 = vunpack.c.l.b16 %v681
        %v1054 = vunpack.c.h.b16 %v681
        %v1055 = vunpack.c.l.b16 %v682
        %v1056 = vunpack.c.h.b16 %v682
        %v1057 = vunpack.c.l.b16 %v683
        %v1058 = vunpack.c.l.b16 %v684
        %v1059 = vunpack.c.h.b16 %v684
        %v1060 = vunpack.c.l.b16 %v685
        %v1061 = vunpack.c.h.b16 %v685
        %v1062 = vunpack.c.l.b16 %v686
        %v1063 = vunpack.c.h.b16 %v686
        %v1064 = vunpack.c.l.b16 %v687
        %v1065 = vunpack.c.l.b16 %v688
        %v1066 = vunpack.c.h.b16 %v688
        %v1067 = vunpack.c.l.b16 %v689
        %v1068 = vunpack.c.h.b16 %v689
        %v1069 = vunpack.c.l.b16 %v690
        %v1070 = vunpack.c.h.b16 %v690
        %v1071 = vunpack.c.l.b16 %v691
        %v1072 = vunpack.c.l.b16 %v692
        %v1073 = vunpack.c.h.b16 %v692
        %v1074 = vunpack.c.l.b16 %v693
        %v1075 = vunpack.c.h.b16 %v693
        %v1076 = vunpack.c.l.b16 %v694
        %v1077 = vunpack.c.h.b16 %v694
        %v1078 = vunpack.c.l.b16 %v695
        %v1079 = vunpack.c.l.b16 %v696
        %v1080 = vunpack.c.h.b16 %v696
        %v1081 = vunpack.c.l.b16 %v697
        %v1082 = vunpack.c.h.b16 %v697
        %v1083 = vunpack.c.l.b16 %v698
        %v1084 = vunpack.c.h.b16 %v698
        %v1085 = vunpack.c.l.b16 %v699
        %v1086 = vunpack.c.l.b16 %v700
        %v1087 = vunpack.c.h.b16 %v700
        %v1088 = vunpack.c.l.b16 %v701
        %v1089 = vunpack.c.h.b16 %v701
        %v1090 = vunpack.c.l.b16 %v702
        %v1091 = vunpack.c.h.b16 %v702
        %v1092 = vunpack.c.l.b16 %v703
        %v1093 = vpack.c.b16 %v876, %v869
        %v1094 = vpack.c.b16 %v877, %v870
        %v1095 = vpack.c.b16 %v878, %v871
        %v1096 = vpack.c.b16 %v879, %v872
        %v1097 = vpack.c.b16 %v880, %v873
        %v1098 = vpack.c.b16 %v881, %v874
        %v1099 = vpack.c.b16 %v882, %v875
        %v1100 = vpack.c.b16 %v890, %v883
        %v1101 = vpack.c.b16 %v891, %v884
        %v1102 = vpack.c.b16 %v892, %v885
        %v1103 = vpack.c.b16 %v893, %v886
        %v1104 = vpack.c.b16 %v894, %v887
        %v1105 = vpack.c.b16 %v895, %v888
        %v1106 = vpack.c.b16 %v896, %v889
        %v1107 = vpack.c.b16 %v904, %v897
        %v1108 = vpack.c.b16 %v905, %v898
        %v1109 = vpack.c.b16 %v906, %v899
        %v1110 = vpack.c.b16 %v907, %v900
        %v1111 = vpack.c.b16 %v908, %v901
        %v1112 = vpack.c.b16 %v909, %v902
        %v1113 = vpack.c.b16 %v910, %v903
        %v1114 = vpack.c.b16 %v918, %v911
        %v1115 = vpack.c.b16 %v919, %v912
        %v1116 = vpack.c.b16 %v920, %v913
        %v1117 = vpack.c.b16 %v921, %v914
        %v1118 = vpack.c.b16 %v922, %v915
        %v1119 = vpack.c.b16 %v923, %v916
        %v1120 = vpack.c.b16 %v924, %v917
        %v1121 = vpack.c.b16 %v932, %v925
        %v1122 = vpack.c.b16 %v933, %v926
        %v1123 = vpack.c.b16 %v934, %v927
        %v1124 = vpack.c.b16 %v935, %v928
        %v1125 = vpack.c.b16 %v936, %v929
        %v1126 = vpack.c.b16 %v937, %v930
        %v1127 = vpack.c.b16 %v938, %v931
        %v1128 = vpack.c.b16 %v946, %v939
        %v1129 = vpack.c.b16 %v947, %v940
        %v1130 = vpack.c.b16 %v948, %v941
        %v1131 = vpack.c.b16 %v949, %v942
        %v1132 = vpack.c.b16 %v950, %v943
        %v1133 = vpack.c.b16 %v951, %v944
        %v1134 = vpack.c.b16 %v952, %v945
        %v1135 = vpack.c.b16 %v960, %v953
        %v1136 = vpack.c.b16 %v961, %v954
        %v1137 = vpack.c.b16 %v962, %v955
        %v1138 = vpack.c.b16 %v963, %v956
        %v1139 = vpack.c.b16 %v964, %v957
        %v1140 = vpack.c.b16 %v965, %v958
        %v1141 = vpack.c.b16 %v966, %v959
        %v1142 = vpack.c.b16 %v974, %v967
        %v1143 = vpack.c.b16 %v975, %v968
        %v1144 = vpack.c.b16 %v976, %v969
        %v1145 = vpack.c.b16 %v977, %v970
        %v1146 = vpack.c.b16 %v978, %v971
        %v1147 = vpack.c.b16 %v979, %v972
        %v1148 = vpack.c.b16 %v980, %v973
        %v1149 = vpack.c.b16 %v988, %v981
        %v1150 = vpack.c.b16 %v989, %v982
        %v1151 = vpack.c.b16 %v990, %v983
        %v1152 = vpack.c.b16 %v991, %v984
        %v1153 = vpack.c.b16 %v992, %v985
        %v1154 = vpack.c.b16 %v993, %v986
        %v1155 = vpack.c.b16 %v994, %v987
        %v1156 = vpack.c.b16 %v1002, %v995
        %v1157 = vpack.c.b16 %v1003, %v996
        %v1158 = vpack.c.b16 %v1004, %v997
        %v1159 = vpack.c.b16 %v1005, %v998
        %v1160 = vpack.c.b16 %v1006, %v999
        %v1161 = vpack.c.b16 %v1007, %v1000
        %v1162 = vpack.c.b16 %v1008, %v1001
        %v1163 = vpack.c.b16 %v1016, %v1009
        %v1164 = vpack.c.b16 %v1017, %v1010
        %v1165 = vpack.c.b16 %v1018, %v1011
        %v1166 = vpack.c.b16 %v1019, %v1012
        %v1167 = vpack.c.b16 %v1020, %v1013
        %v1168 = vpack.c.b16 %v1021, %v1014
        %v1169 = vpack.c.b16 %v1022, %v1015
        %v1170 = vpack.c.b16 %v1030, %v1023
        %v1171 = vpack.c.b16 %v1031, %v1024
        %v1172 = vpack.c.b16 %v1032, %v1025
        %v1173 = vpack.c.b16 %v1033, %v1026
        %v1174 = vpack.c.b16 %v1034, %v1027
        %v1175 = vpack.c.b16 %v1035, %v1028
        %v1176 = vpack.c.b16 %v1036, %v1029
        %v1177 = vpack.c.b16 %v1044, %v1037
        %v1178 = vpack.c.b16 %v1045, %v1038
        %v1179 = vpack.c.b16 %v1046, %v1039
        %v1180 = vpack.c.b16 %v1047, %v1040
        %v1181 = vpack.c.b16 %v1048, %v1041
        %v1182 = vpack.c.b16 %v1049, %v1042
        %v1183 = vpack.c.b16 %v1050, %v1043
        %v1184 = vpack.c.b16 %v1058, %v1051
        %v1185 = vpack.c.b16 %v1059, %v1052
        %v1186 = vpack.c.b16 %v1060, %v1053
        %v1187 = vpack.c.b16 %v1061, %v1054
        %v1188 = vpack.c.b16 %v1062, %v1055
        %v1189 = vpack.c.b16 %v1063, %v1056
        %v1190 = vpack.c.b16 %v1064, %v1057
        %v1191 = vpack.c.b16 %v1072, %v1065
        %v1192 = vpack.c.b16 %v1073, %v1066
        %v1193 = vpack.c.b16 %v1074, %v1067
        %v1194 = vpack.c.b16 %v1075, %v1068
        %v1195 = vpack.c.b16 %v1076, %v1069
        %v1196 = vpack.c.b16 %v1077, %v1070
        %v1197 = vpack.c.b16 %v1078, %v1071
        %v1198 = vpack.c.b16 %v1086, %v1079
        %v1199 = vpack.c.b16 %v1087, %v1080
        %v1200 = vpack.c.b16 %v1088, %v1081
        %v1201 = vpack.c.b16 %v1089, %v1082
        %v1202 = vpack.c.b16 %v1090, %v1083
        %v1203 = vpack.c.b16 %v1091, %v1084
        %v1204 = vpack.c.b16 %v1092, %v1085
        %1317 = vmatprep.subr.bf16.mxu0 %v1094
        %1318 = vmatpush1.bf16.msra.mxu0 %v1093
        %1319 = vmatprep.subr.bf16.mxu0 %v1101
        %1320 = vmatpush1.bf16.msra.mxu0 %v1100
        %1321 = vmatprep.subr.bf16.mxu0 %v1108
        %1322 = vmatpush1.bf16.msra.mxu0 %v1107
        %1323 = vmatprep.subr.bf16.mxu0 %v1115
        %1324 = vmatpush1.bf16.msra.mxu0 %v1114
        %1325 = vmatprep.subr.bf16.mxu0 %v1122
        %1326 = vmatpush1.bf16.msra.mxu0 %v1121
        %1327 = vmatprep.subr.bf16.mxu0 %v1129
        %1328 = vmatpush1.bf16.msra.mxu0 %v1128
        %1329 = vmatprep.subr.bf16.mxu0 %v1136
        %1330 = vmatpush1.bf16.msra.mxu0 %v1135
        %1331 = vmatprep.subr.bf16.mxu0 %v1143
        %1332 = vmatpush1.bf16.msra.mxu0 %v1142
        %1333 = vmatprep.subr.bf16.mxu0 %v1150
        %1334 = vmatpush1.bf16.msra.mxu0 %v1149
        %1335 = vmatprep.subr.bf16.mxu0 %v1157
        %1336 = vmatpush1.bf16.msra.mxu0 %v1156
        %1337 = vmatprep.subr.bf16.mxu0 %v1164
        %1338 = vmatpush1.bf16.msra.mxu0 %v1163
        %1339 = vmatprep.subr.bf16.mxu0 %v1171
        %1340 = vmatpush1.bf16.msra.mxu0 %v1170
        %1341 = vmatprep.subr.bf16.mxu0 %v1178
        %1342 = vmatpush1.bf16.msra.mxu0 %v1177
        %1343 = vmatprep.subr.bf16.mxu0 %v1185
        %1344 = vmatpush1.bf16.msra.mxu0 %v1184
        %1345 = vmatprep.subr.bf16.mxu0 %v1192
        %1346 = vmatpush1.bf16.msra.mxu0 %v1191
        %1347 = vmatprep.subr.bf16.mxu0 %v1199
        %1348 = vmatpush1.bf16.msra.mxu0 %v1198
        %1349 = vmatprep.mubr.bf16.mxu0 %v561
        %1350 = vmatmul.mubr.bf16.gmra.mrb[0].mxu0 %v560
        %v1351 = vpop.f32.mrb[0].mxu0
        %v1352 = vadd.f32 %v709, %v1351
        %v1353 = vpop.f32.mrb[0].mxu0
        %v1354 = vadd.f32 %v713, %v1353
        %v1355 = vpop.f32.mrb[0].mxu0
        %v1356 = vadd.f32 %v709, %v1355
        %v1357 = vpop.f32.mrb[0].mxu0
        %v1358 = vadd.f32 %v713, %v1357
        %1359 = vmatprep.mubr.bf16.mxu0 %v563
        %1360 = vmatmul.mubr.bf16.gmra.mrb[0].mxu0 %v562
        %v1361 = vpop.f32.mrb[0].mxu0
        %v1362 = vadd.f32 %v709, %v1361
        %v1363 = vpop.f32.mrb[0].mxu0
        %v1364 = vadd.f32 %v713, %v1363
        %v1365 = vpop.f32.mrb[0].mxu0
        %v1366 = vadd.f32 %v709, %v1365
        %v1367 = vpop.f32.mrb[0].mxu0
        %v1368 = vadd.f32 %v713, %v1367
        %1369 = vmatprep.mubr.bf16.mxu0 %v565
        %1370 = vmatmul.mubr.bf16.gmra.mrb[0].mxu0 %v564
        %v1371 = vpop.f32.mrb[0].mxu0
        %v1372 = vadd.f32 %v709, %v1371
        %v1373 = vpop.f32.mrb[0].mxu0
        %v1374 = vadd.f32 %v713, %v1373
        %v1375 = vpop.f32.mrb[0].mxu0
        %v1376 = vadd.f32 %v709, %v1375
        %v1377 = vpop.f32.mrb[0].mxu0
        %v1378 = vadd.f32 %v713, %v1377
        %1379 = vmatprep.mubr.bf16.mxu0 %v567
        %1380 = vmatmul.mubr.bf16.gmra.mrb[0].mxu0 %v566
        %v1381 = vpop.f32.mrb[0].mxu0
        %v1382 = vadd.f32 %v709, %v1381
        %v1383 = vpop.f32.mrb[0].mxu0
        %v1384 = vadd.f32 %v713, %v1383
        %v1385 = vpop.f32.mrb[0].mxu0
        %v1386 = vadd.f32 %v709, %v1385
        %v1387 = vpop.f32.mrb[0].mxu0
        %v1388 = vadd.f32 %v713, %v1387
        %1389 = vmatprep.mubr.bf16.mxu0 %v569
        %1390 = vmatmul.mubr.bf16.gmra.mrb[0].mxu0 %v568
        %v1391 = vpop.f32.mrb[0].mxu0
        %v1392 = vadd.f32 %v709, %v1391
        %v1393 = vpop.f32.mrb[0].mxu0
        %v1394 = vadd.f32 %v713, %v1393
        %v1395 = vpop.f32.mrb[0].mxu0
        %v1396 = vadd.f32 %v709, %v1395
        %v1397 = vpop.f32.mrb[0].mxu0
        %v1398 = vadd.f32 %v713, %v1397
        %1399 = vmatprep.mubr.bf16.mxu0 %v571
        %1400 = vmatmul.mubr.bf16.gmra.mrb[0].mxu0 %v570
        %v1401 = vpop.f32.mrb[0].mxu0
        %v1402 = vadd.f32 %v709, %v1401
        %v1403 = vpop.f32.mrb[0].mxu0
        %v1404 = vadd.f32 %v713, %v1403
        %v1405 = vpop.f32.mrb[0].mxu0
        %v1406 = vadd.f32 %v709, %v1405
        %v1407 = vpop.f32.mrb[0].mxu0
        %v1408 = vadd.f32 %v713, %v1407
        %1409 = vmatprep.mubr.bf16.mxu0 %v573
        %1410 = vmatmul.mubr.bf16.gmra.mrb[0].mxu0 %v572
        %v1411 = vpop.f32.mrb[0].mxu0
        %v1412 = vadd.f32 %v709, %v1411
        %v1413 = vpop.f32.mrb[0].mxu0
        %v1414 = vadd.f32 %v713, %v1413
        %v1415 = vpop.f32.mrb[0].mxu0
        %v1416 = vadd.f32 %v709, %v1415
        %v1417 = vpop.f32.mrb[0].mxu0
        %v1418 = vadd.f32 %v713, %v1417
        %1419 = vmatprep.mubr.bf16.mxu0 %v575
        %1420 = vmatmul.mubr.bf16.gmra.mrb[0].mxu0 %v574
        %v1421 = vpop.f32.mrb[0].mxu0
        %v1422 = vadd.f32 %v709, %v1421
        %v1423 = vpop.f32.mrb[0].mxu0
        %v1424 = vadd.f32 %v713, %v1423
        %v1425 = vpop.f32.mrb[0].mxu0
        %v1426 = vadd.f32 %v709, %v1425
        %v1427 = vpop.f32.mrb[0].mxu0
        %v1428 = vadd.f32 %v713, %v1427
        %1429 = vdwg.mxu0
        %1430 = vmatprep.subr.bf16.mxu0 %v1096
        %1431 = vmatpush1.bf16.msra.mxu0 %v1095
        %1432 = vmatprep.subr.bf16.mxu0 %v1103
        %1433 = vmatpush1.bf16.msra.mxu0 %v1102
        %1434 = vmatprep.subr.bf16.mxu0 %v1110
        %1435 = vmatpush1.bf16.msra.mxu0 %v1109
        %1436 = vmatprep.subr.bf16.mxu0 %v1117
        %1437 = vmatpush1.bf16.msra.mxu0 %v1116
        %1438 = vmatprep.subr.bf16.mxu0 %v1124
        %1439 = vmatpush1.bf16.msra.mxu0 %v1123
        %1440 = vmatprep.subr.bf16.mxu0 %v1131
        %1441 = vmatpush1.bf16.msra.mxu0 %v1130
        %1442 = vmatprep.subr.bf16.mxu0 %v1138
        %1443 = vmatpush1.bf16.msra.mxu0 %v1137
        %1444 = vmatprep.subr.bf16.mxu0 %v1145
        %1445 = vmatpush1.bf16.msra.mxu0 %v1144
        %1446 = vmatprep.subr.bf16.mxu0 %v1152
        %1447 = vmatpush1.bf16.msra.mxu0 %v1151
        %1448 = vmatprep.subr.bf16.mxu0 %v1159
        %1449 = vmatpush1.bf16.msra.mxu0 %v1158
        %1450 = vmatprep.subr.bf16.mxu0 %v1166
        %1451 = vmatpush1.bf16.msra.mxu0 %v1165
        %1452 = vmatprep.subr.bf16.mxu0 %v1173
        %1453 = vmatpush1.bf16.msra.mxu0 %v1172
        %1454 = vmatprep.subr.bf16.mxu0 %v1180
        %1455 = vmatpush1.bf16.msra.mxu0 %v1179
        %1456 = vmatprep.subr.bf16.mxu0 %v1187
        %1457 = vmatpush1.bf16.msra.mxu0 %v1186
        %1458 = vmatprep.subr.bf16.mxu0 %v1194
        %1459 = vmatpush1.bf16.msra.mxu0 %v1193
        %1460 = vmatprep.subr.bf16.mxu0 %v1201
        %1461 = vmatpush1.bf16.msra.mxu0 %v1200
        %1462 = vmatprep.mubr.bf16.mxu0 %v561
        %1463 = vmatmul.mubr.bf16.gmra.mrb[0].mxu0 %v560
        %v1464 = vpop.f32.mrb[0].mxu0
        %v1465 = vadd.f32 %v717, %v1464
        %v1466 = vpop.f32.mrb[0].mxu0
        %v1467 = vadd.f32 %v721, %v1466
        %v1468 = vpop.f32.mrb[0].mxu0
        %v1469 = vadd.f32 %v717, %v1468
        %v1470 = vpop.f32.mrb[0].mxu0
        %v1471 = vadd.f32 %v721, %v1470
        %1472 = vmatprep.mubr.bf16.mxu0 %v563
        %1473 = vmatmul.mubr.bf16.gmra.mrb[0].mxu0 %v562
        %v1474 = vpop.f32.mrb[0].mxu0
        %v1475 = vadd.f32 %v717, %v1474
        %v1476 = vpop.f32.mrb[0].mxu0
        %v1477 = vadd.f32 %v721, %v1476
        %v1478 = vpop.f32.mrb[0].mxu0
        %v1479 = vadd.f32 %v717, %v1478
        %v1480 = vpop.f32.mrb[0].mxu0
        %v1481 = vadd.f32 %v721, %v1480
        %1482 = vmatprep.mubr.bf16.mxu0 %v565
        %1483 = vmatmul.mubr.bf16.gmra.mrb[0].mxu0 %v564
        %v1484 = vpop.f32.mrb[0].mxu0
        %v1485 = vadd.f32 %v717, %v1484
        %v1486 = vpop.f32.mrb[0].mxu0
        %v1487 = vadd.f32 %v721, %v1486
        %v1488 = vpop.f32.mrb[0].mxu0
        %v1489 = vadd.f32 %v717, %v1488
        %v1490 = vpop.f32.mrb[0].mxu0
        %v1491 = vadd.f32 %v721, %v1490
        %1492 = vmatprep.mubr.bf16.mxu0 %v567
        %1493 = vmatmul.mubr.bf16.gmra.mrb[0].mxu0 %v566
        %v1494 = vpop.f32.mrb[0].mxu0
        %v1495 = vadd.f32 %v717, %v1494
        %v1496 = vpop.f32.mrb[0].mxu0
        %v1497 = vadd.f32 %v721, %v1496
        %v1498 = vpop.f32.mrb[0].mxu0
        %v1499 = vadd.f32 %v717, %v1498
        %v1500 = vpop.f32.mrb[0].mxu0
        %v1501 = vadd.f32 %v721, %v1500
        %1502 = vmatprep.mubr.bf16.mxu0 %v569
        %1503 = vmatmul.mubr.bf16.gmra.mrb[0].mxu0 %v568
        %v1504 = vpop.f32.mrb[0].mxu0
        %v1505 = vadd.f32 %v717, %v1504
        %v1506 = vpop.f32.mrb[0].mxu0
        %v1507 = vadd.f32 %v721, %v1506
        %v1508 = vpop.f32.mrb[0].mxu0
        %v1509 = vadd.f32 %v717, %v1508
        %v1510 = vpop.f32.mrb[0].mxu0
        %v1511 = vadd.f32 %v721, %v1510
        %1512 = vmatprep.mubr.bf16.mxu0 %v571
        %1513 = vmatmul.mubr.bf16.gmra.mrb[0].mxu0 %v570
        %v1514 = vpop.f32.mrb[0].mxu0
        %v1515 = vadd.f32 %v717, %v1514
        %v1516 = vpop.f32.mrb[0].mxu0
        %v1517 = vadd.f32 %v721, %v1516
        %v1518 = vpop.f32.mrb[0].mxu0
        %v1519 = vadd.f32 %v717, %v1518
        %v1520 = vpop.f32.mrb[0].mxu0
        %v1521 = vadd.f32 %v721, %v1520
        %1522 = vmatprep.mubr.bf16.mxu0 %v573
        %1523 = vmatmul.mubr.bf16.gmra.mrb[0].mxu0 %v572
        %v1524 = vpop.f32.mrb[0].mxu0
        %v1525 = vadd.f32 %v717, %v1524
        %v1526 = vpop.f32.mrb[0].mxu0
        %v1527 = vadd.f32 %v721, %v1526
        %v1528 = vpop.f32.mrb[0].mxu0
        %v1529 = vadd.f32 %v717, %v1528
        %v1530 = vpop.f32.mrb[0].mxu0
        %v1531 = vadd.f32 %v721, %v1530
        %1532 = vmatprep.mubr.bf16.mxu0 %v575
        %1533 = vmatmul.mubr.bf16.gmra.mrb[0].mxu0 %v574
        %v1534 = vpop.f32.mrb[0].mxu0
        %v1535 = vadd.f32 %v717, %v1534
        %v1536 = vpop.f32.mrb[0].mxu0
        %v1537 = vadd.f32 %v721, %v1536
        %v1538 = vpop.f32.mrb[0].mxu0
        %v1539 = vadd.f32 %v717, %v1538
        %v1540 = vpop.f32.mrb[0].mxu0
        %v1541 = vadd.f32 %v721, %v1540
        %1542 = vdwg.mxu0
        %1543 = vmatprep.subr.bf16.mxu0 %v1098
        %1544 = vmatpush1.bf16.msra.mxu0 %v1097
        %1545 = vmatprep.subr.bf16.mxu0 %v1105
        %1546 = vmatpush1.bf16.msra.mxu0 %v1104
        %1547 = vmatprep.subr.bf16.mxu0 %v1112
        %1548 = vmatpush1.bf16.msra.mxu0 %v1111
        %1549 = vmatprep.subr.bf16.mxu0 %v1119
        %1550 = vmatpush1.bf16.msra.mxu0 %v1118
        %1551 = vmatprep.subr.bf16.mxu0 %v1126
        %1552 = vmatpush1.bf16.msra.mxu0 %v1125
        %1553 = vmatprep.subr.bf16.mxu0 %v1133
        %1554 = vmatpush1.bf16.msra.mxu0 %v1132
        %1555 = vmatprep.subr.bf16.mxu0 %v1140
        %1556 = vmatpush1.bf16.msra.mxu0 %v1139
        %1557 = vmatprep.subr.bf16.mxu0 %v1147
        %1558 = vmatpush1.bf16.msra.mxu0 %v1146
        %1559 = vmatprep.subr.bf16.mxu0 %v1154
        %1560 = vmatpush1.bf16.msra.mxu0 %v1153
        %1561 = vmatprep.subr.bf16.mxu0 %v1161
        %1562 = vmatpush1.bf16.msra.mxu0 %v1160
        %1563 = vmatprep.subr.bf16.mxu0 %v1168
        %1564 = vmatpush1.bf16.msra.mxu0 %v1167
        %1565 = vmatprep.subr.bf16.mxu0 %v1175
        %1566 = vmatpush1.bf16.msra.mxu0 %v1174
        %1567 = vmatprep.subr.bf16.mxu0 %v1182
        %1568 = vmatpush1.bf16.msra.mxu0 %v1181
        %1569 = vmatprep.subr.bf16.mxu0 %v1189
        %1570 = vmatpush1.bf16.msra.mxu0 %v1188
        %1571 = vmatprep.subr.bf16.mxu0 %v1196
        %1572 = vmatpush1.bf16.msra.mxu0 %v1195
        %1573 = vmatprep.subr.bf16.mxu0 %v1203
        %1574 = vmatpush1.bf16.msra.mxu0 %v1202
        %1575 = vmatprep.mubr.bf16.mxu0 %v561
        %1576 = vmatmul.mubr.bf16.gmra.mrb[0].mxu0 %v560
        %v1577 = vpop.f32.mrb[0].mxu0
        %v1578 = vadd.f32 %v725, %v1577
        %v1579 = vpop.f32.mrb[0].mxu0
        %v1580 = vadd.f32 %v729, %v1579
        %v1581 = vpop.f32.mrb[0].mxu0
        %v1582 = vadd.f32 %v725, %v1581
        %v1583 = vpop.f32.mrb[0].mxu0
        %v1584 = vadd.f32 %v729, %v1583
        %1585 = vmatprep.mubr.bf16.mxu0 %v563
        %1586 = vmatmul.mubr.bf16.gmra.mrb[0].mxu0 %v562
        %v1587 = vpop.f32.mrb[0].mxu0
        %v1588 = vadd.f32 %v725, %v1587
        %v1589 = vpop.f32.mrb[0].mxu0
        %v1590 = vadd.f32 %v729, %v1589
        %v1591 = vpop.f32.mrb[0].mxu0
        %v1592 = vadd.f32 %v725, %v1591
        %v1593 = vpop.f32.mrb[0].mxu0
        %v1594 = vadd.f32 %v729, %v1593
        %1595 = vmatprep.mubr.bf16.mxu0 %v565
        %1596 = vmatmul.mubr.bf16.gmra.mrb[0].mxu0 %v564
        %v1597 = vpop.f32.mrb[0].mxu0
        %v1598 = vadd.f32 %v725, %v1597
        %v1599 = vpop.f32.mrb[0].mxu0
        %v1600 = vadd.f32 %v729, %v1599
        %v1601 = vpop.f32.mrb[0].mxu0
        %v1602 = vadd.f32 %v725, %v1601
        %v1603 = vpop.f32.mrb[0].mxu0
        %v1604 = vadd.f32 %v729, %v1603
        %1605 = vmatprep.mubr.bf16.mxu0 %v567
        %1606 = vmatmul.mubr.bf16.gmra.mrb[0].mxu0 %v566
        %v1607 = vpop.f32.mrb[0].mxu0
        %v1608 = vadd.f32 %v725, %v1607
        %v1609 = vpop.f32.mrb[0].mxu0
        %v1610 = vadd.f32 %v729, %v1609
        %v1611 = vpop.f32.mrb[0].mxu0
        %v1612 = vadd.f32 %v725, %v1611
        %v1613 = vpop.f32.mrb[0].mxu0
        %v1614 = vadd.f32 %v729, %v1613
        %1615 = vmatprep.mubr.bf16.mxu0 %v569
        %1616 = vmatmul.mubr.bf16.gmra.mrb[0].mxu0 %v568
        %v1617 = vpop.f32.mrb[0].mxu0
        %v1618 = vadd.f32 %v725, %v1617
        %v1619 = vpop.f32.mrb[0].mxu0
        %v1620 = vadd.f32 %v729, %v1619
        %v1621 = vpop.f32.mrb[0].mxu0
        %v1622 = vadd.f32 %v725, %v1621
        %v1623 = vpop.f32.mrb[0].mxu0
        %v1624 = vadd.f32 %v729, %v1623
        %1625 = vmatprep.mubr.bf16.mxu0 %v571
        %1626 = vmatmul.mubr.bf16.gmra.mrb[0].mxu0 %v570
        %v1627 = vpop.f32.mrb[0].mxu0
        %v1628 = vadd.f32 %v725, %v1627
        %v1629 = vpop.f32.mrb[0].mxu0
        %v1630 = vadd.f32 %v729, %v1629
        %v1631 = vpop.f32.mrb[0].mxu0
        %v1632 = vadd.f32 %v725, %v1631
        %v1633 = vpop.f32.mrb[0].mxu0
        %v1634 = vadd.f32 %v729, %v1633
        %1635 = vmatprep.mubr.bf16.mxu0 %v573
        %1636 = vmatmul.mubr.bf16.gmra.mrb[0].mxu0 %v572
        %v1637 = vpop.f32.mrb[0].mxu0
        %v1638 = vadd.f32 %v725, %v1637
        %v1639 = vpop.f32.mrb[0].mxu0
        %v1640 = vadd.f32 %v729, %v1639
        %v1641 = vpop.f32.mrb[0].mxu0
        %v1642 = vadd.f32 %v725, %v1641
        %v1643 = vpop.f32.mrb[0].mxu0
        %v1644 = vadd.f32 %v729, %v1643
        %1645 = vmatprep.mubr.bf16.mxu0 %v575
        %1646 = vmatmul.mubr.bf16.gmra.mrb[0].mxu0 %v574
        %v1647 = vpop.f32.mrb[0].mxu0
        %v1648 = vadd.f32 %v725, %v1647
        %v1649 = vpop.f32.mrb[0].mxu0
        %v1650 = vadd.f32 %v729, %v1649
        %v1651 = vpop.f32.mrb[0].mxu0
        %v1652 = vadd.f32 %v725, %v1651
        %v1653 = vpop.f32.mrb[0].mxu0
        %v1654 = vadd.f32 %v729, %v1653
        %1655 = vdwg.mxu0
        %1656 = vmatprep.subr.bf16.mxu0 0
        %1657 = vmatpush1.bf16.msra.mxu0 %v1099
        %1658 = vmatprep.subr.bf16.mxu0 0
        %1659 = vmatpush1.bf16.msra.mxu0 %v1106
        %1660 = vmatprep.subr.bf16.mxu0 0
        %1661 = vmatpush1.bf16.msra.mxu0 %v1113
        %1662 = vmatprep.subr.bf16.mxu0 0
        %1663 = vmatpush1.bf16.msra.mxu0 %v1120
        %1664 = vmatprep.subr.bf16.mxu0 0
        %1665 = vmatpush1.bf16.msra.mxu0 %v1127
        %1666 = vmatprep.subr.bf16.mxu0 0
        %1667 = vmatpush1.bf16.msra.mxu0 %v1134
        %1668 = vmatprep.subr.bf16.mxu0 0
        %1669 = vmatpush1.bf16.msra.mxu0 %v1141
        %1670 = vmatprep.subr.bf16.mxu0 0
        %1671 = vmatpush1.bf16.msra.mxu0 %v1148
        %1672 = vmatprep.subr.bf16.mxu0 0
        %1673 = vmatpush1.bf16.msra.mxu0 %v1155
        %1674 = vmatprep.subr.bf16.mxu0 0
        %1675 = vmatpush1.bf16.msra.mxu0 %v1162
        %1676 = vmatprep.subr.bf16.mxu0 0
        %1677 = vmatpush1.bf16.msra.mxu0 %v1169
        %1678 = vmatprep.subr.bf16.mxu0 0
        %1679 = vmatpush1.bf16.msra.mxu0 %v1176
        %1680 = vmatprep.subr.bf16.mxu0 0
        %1681 = vmatpush1.bf16.msra.mxu0 %v1183
        %1682 = vmatprep.subr.bf16.mxu0 0
        %1683 = vmatpush1.bf16.msra.mxu0 %v1190
        %1684 = vmatprep.subr.bf16.mxu0 0
        %1685 = vmatpush1.bf16.msra.mxu0 %v1197
        %1686 = vmatprep.subr.bf16.mxu0 0
        %1687 = vmatpush1.bf16.msra.mxu0 %v1204
        %1688 = vmatprep.mubr.bf16.mxu0 %v561
        %1689 = vmatmul.mubr.bf16.gmra.mrb[0].mxu0 %v560
        %v1690 = vpop.f32.mrb[0].mxu0
        %v1691 = vadd.f32 %v733, %v1690
        %v1692 = vpop.f32.mrb[0].mxu0
        %v1693 = vpop.f32.mrb[0].mxu0
        %v1694 = vadd.f32 %v733, %v1693
        %v1695 = vpop.f32.mrb[0].mxu0
        %1696 = vmatprep.mubr.bf16.mxu0 %v563
        %1697 = vmatmul.mubr.bf16.gmra.mrb[0].mxu0 %v562
        %v1698 = vpop.f32.mrb[0].mxu0
        %v1699 = vadd.f32 %v733, %v1698
        %v1700 = vpop.f32.mrb[0].mxu0
        %v1701 = vpop.f32.mrb[0].mxu0
        %v1702 = vadd.f32 %v733, %v1701
        %v1703 = vpop.f32.mrb[0].mxu0
        %1704 = vmatprep.mubr.bf16.mxu0 %v565
        %1705 = vmatmul.mubr.bf16.gmra.mrb[0].mxu0 %v564
        %v1706 = vpop.f32.mrb[0].mxu0
        %v1707 = vadd.f32 %v733, %v1706
        %v1708 = vpop.f32.mrb[0].mxu0
        %v1709 = vpop.f32.mrb[0].mxu0
        %v1710 = vadd.f32 %v733, %v1709
        %v1711 = vpop.f32.mrb[0].mxu0
        %1712 = vmatprep.mubr.bf16.mxu0 %v567
        %1713 = vmatmul.mubr.bf16.gmra.mrb[0].mxu0 %v566
        %v1714 = vpop.f32.mrb[0].mxu0
        %v1715 = vadd.f32 %v733, %v1714
        %v1716 = vpop.f32.mrb[0].mxu0
        %v1717 = vpop.f32.mrb[0].mxu0
        %v1718 = vadd.f32 %v733, %v1717
        %v1719 = vpop.f32.mrb[0].mxu0
        %1720 = vmatprep.mubr.bf16.mxu0 %v569
        %1721 = vmatmul.mubr.bf16.gmra.mrb[0].mxu0 %v568
        %v1722 = vpop.f32.mrb[0].mxu0
        %v1723 = vadd.f32 %v733, %v1722
        %v1724 = vpop.f32.mrb[0].mxu0
        %v1725 = vpop.f32.mrb[0].mxu0
        %v1726 = vadd.f32 %v733, %v1725
        %v1727 = vpop.f32.mrb[0].mxu0
        %1728 = vmatprep.mubr.bf16.mxu0 %v571
        %1729 = vmatmul.mubr.bf16.gmra.mrb[0].mxu0 %v570
        %v1730 = vpop.f32.mrb[0].mxu0
        %v1731 = vadd.f32 %v733, %v1730
        %v1732 = vpop.f32.mrb[0].mxu0
        %v1733 = vpop.f32.mrb[0].mxu0
        %v1734 = vadd.f32 %v733, %v1733
        %v1735 = vpop.f32.mrb[0].mxu0
        %1736 = vmatprep.mubr.bf16.mxu0 %v573
        %1737 = vmatmul.mubr.bf16.gmra.mrb[0].mxu0 %v572
        %v1738 = vpop.f32.mrb[0].mxu0
        %v1739 = vadd.f32 %v733, %v1738
        %v1740 = vpop.f32.mrb[0].mxu0
        %v1741 = vpop.f32.mrb[0].mxu0
        %v1742 = vadd.f32 %v733, %v1741
        %v1743 = vpop.f32.mrb[0].mxu0
        %1744 = vmatprep.mubr.bf16.mxu0 %v575
        %1745 = vmatmul.mubr.bf16.gmra.mrb[0].mxu0 %v574
        %v1746 = vpop.f32.mrb[0].mxu0
        %v1747 = vadd.f32 %v733, %v1746
        %v1748 = vpop.f32.mrb[0].mxu0
        %v1749 = vpop.f32.mrb[0].mxu0
        %v1750 = vadd.f32 %v733, %v1749
        %v1751 = vpop.f32.mrb[0].mxu0
        %1752 = vdwg.mxu0
        %v1753 = vtanh.pop %v1352
        %v1754 = vtanh.pop %v1354
        %v1755 = vtanh.pop %v1465
        %v1756 = vtanh.pop %v1467
        %v1757 = vtanh.pop %v1578
        %v1758 = vtanh.pop %v1580
        %v1759 = vtanh.pop %v1691
        %v1760 = vtanh.pop %v1356
        %v1761 = vtanh.pop %v1358
        %v1762 = vtanh.pop %v1469
        %v1763 = vtanh.pop %v1471
        %v1764 = vtanh.pop %v1582
        %v1765 = vtanh.pop %v1584
        %v1766 = vtanh.pop %v1694
        %v1767 = vtanh.pop %v1362
        %v1768 = vtanh.pop %v1364
        %v1769 = vtanh.pop %v1475
        %v1770 = vtanh.pop %v1477
        %v1771 = vtanh.pop %v1588
        %v1772 = vtanh.pop %v1590
        %v1773 = vtanh.pop %v1699
        %v1774 = vtanh.pop %v1366
        %v1775 = vtanh.pop %v1368
        %v1776 = vtanh.pop %v1479
        %v1777 = vtanh.pop %v1481
        %v1778 = vtanh.pop %v1592
        %v1779 = vtanh.pop %v1594
        %v1780 = vtanh.pop %v1702
        %v1781 = vtanh.pop %v1372
        %v1782 = vtanh.pop %v1374
        %v1783 = vtanh.pop %v1485
        %v1784 = vtanh.pop %v1487
        %v1785 = vtanh.pop %v1598
        %v1786 = vtanh.pop %v1600
        %v1787 = vtanh.pop %v1707
        %v1788 = vtanh.pop %v1376
        %v1789 = vtanh.pop %v1378
        %v1790 = vtanh.pop %v1489
        %v1791 = vtanh.pop %v1491
        %v1792 = vtanh.pop %v1602
        %v1793 = vtanh.pop %v1604
        %v1794 = vtanh.pop %v1710
        %v1795 = vtanh.pop %v1382
        %v1796 = vtanh.pop %v1384
        %v1797 = vtanh.pop %v1495
        %v1798 = vtanh.pop %v1497
        %v1799 = vtanh.pop %v1608
        %v1800 = vtanh.pop %v1610
        %v1801 = vtanh.pop %v1715
        %v1802 = vtanh.pop %v1386
        %v1803 = vtanh.pop %v1388
        %v1804 = vtanh.pop %v1499
        %v1805 = vtanh.pop %v1501
        %v1806 = vtanh.pop %v1612
        %v1807 = vtanh.pop %v1614
        %v1808 = vtanh.pop %v1718
        %v1809 = vtanh.pop %v1392
        %v1810 = vtanh.pop %v1394
        %v1811 = vtanh.pop %v1505
        %v1812 = vtanh.pop %v1507
        %v1813 = vtanh.pop %v1618
        %v1814 = vtanh.pop %v1620
        %v1815 = vtanh.pop %v1723
        %v1816 = vtanh.pop %v1396
        %v1817 = vtanh.pop %v1398
        %v1818 = vtanh.pop %v1509
        %v1819 = vtanh.pop %v1511
        %v1820 = vtanh.pop %v1622
        %v1821 = vtanh.pop %v1624
        %v1822 = vtanh.pop %v1726
        %v1823 = vtanh.pop %v1402
        %v1824 = vtanh.pop %v1404
        %v1825 = vtanh.pop %v1515
        %v1826 = vtanh.pop %v1517
        %v1827 = vtanh.pop %v1628
        %v1828 = vtanh.pop %v1630
        %v1829 = vtanh.pop %v1731
        %v1830 = vtanh.pop %v1406
        %v1831 = vtanh.pop %v1408
        %v1832 = vtanh.pop %v1519
        %v1833 = vtanh.pop %v1521
        %v1834 = vtanh.pop %v1632
        %v1835 = vtanh.pop %v1634
        %v1836 = vtanh.pop %v1734
        %v1837 = vtanh.pop %v1412
        %v1838 = vtanh.pop %v1414
        %v1839 = vtanh.pop %v1525
        %v1840 = vtanh.pop %v1527
        %v1841 = vtanh.pop %v1638
        %v1842 = vtanh.pop %v1640
        %v1843 = vtanh.pop %v1739
        %v1844 = vtanh.pop %v1416
        %v1845 = vtanh.pop %v1418
        %v1846 = vtanh.pop %v1529
        %v1847 = vtanh.pop %v1531
        %v1848 = vtanh.pop %v1642
        %v1849 = vtanh.pop %v1644
        %v1850 = vtanh.pop %v1742
        %v1851 = vtanh.pop %v1422
        %v1852 = vtanh.pop %v1424
        %v1853 = vtanh.pop %v1535
        %v1854 = vtanh.pop %v1537
        %v1855 = vtanh.pop %v1648
        %v1856 = vtanh.pop %v1650
        %v1857 = vtanh.pop %v1747
        %v1858 = vtanh.pop %v1426
        %v1859 = vtanh.pop %v1428
        %v1860 = vtanh.pop %v1539
        %v1861 = vtanh.pop %v1541
        %v1862 = vtanh.pop %v1652
        %v1863 = vtanh.pop %v1654
        %v1864 = vtanh.pop %v1750
        %1865 = vst [vmem:[%s233] sm:$0xff] %v1753
        %1866 = vst [vmem:[%s233 + $0x8] sm:$0xff] %v1754
        %1867 = vst [vmem:[%s233 + $0x10] sm:$0xff] %v1755
        %1868 = vst [vmem:[%s233 + $0x18] sm:$0xff] %v1756
        %1869 = vst [vmem:[%s233 + $0x20] sm:$0xff] %v1757
        %1870 = vst [vmem:[%s233 + $0x28] sm:$0xff] %v1758
        %1871 = vst [vmem:[%s233 + $0x30] sm:$0xff] %v1759
        %1872 = vst [vmem:[%s233 + $0x38] sm:$0xff] %v1760
        %1873 = vst [vmem:[%s233 + $0x40] sm:$0xff] %v1761
        %1874 = vst [vmem:[%s233 + $0x48] sm:$0xff] %v1762
        %1875 = vst [vmem:[%s233 + $0x50] sm:$0xff] %v1763
        %1876 = vst [vmem:[%s233 + $0x58] sm:$0xff] %v1764
        %1877 = vst [vmem:[%s233 + $0x60] sm:$0xff] %v1765
        %1878 = vst [vmem:[%s233 + $0x68] sm:$0xff] %v1766
        %1879 = vst [vmem:[%s233 + $0x70] sm:$0xff] %v1767
        %1880 = vst [vmem:[%s233 + $0x78] sm:$0xff] %v1768
        %1881 = vst [vmem:[%s233 + $0x80] sm:$0xff] %v1769
        %1882 = vst [vmem:[%s233 + $0x88] sm:$0xff] %v1770
        %1883 = vst [vmem:[%s233 + $0x90] sm:$0xff] %v1771
        %1884 = vst [vmem:[%s233 + $0x98] sm:$0xff] %v1772
        %1885 = vst [vmem:[%s233 + $0xa0] sm:$0xff] %v1773
        %1886 = vst [vmem:[%s233 + $0xa8] sm:$0xff] %v1774
        %1887 = vst [vmem:[%s233 + $0xb0] sm:$0xff] %v1775
        %1888 = vst [vmem:[%s233 + $0xb8] sm:$0xff] %v1776
        %1889 = vst [vmem:[%s233 + $0xc0] sm:$0xff] %v1777
        %1890 = vst [vmem:[%s233 + $0xc8] sm:$0xff] %v1778
        %1891 = vst [vmem:[%s233 + $0xd0] sm:$0xff] %v1779
        %1892 = vst [vmem:[%s233 + $0xd8] sm:$0xff] %v1780
        %1893 = vst [vmem:[%s233 + $0xe0] sm:$0xff] %v1781
        %1894 = vst [vmem:[%s233 + $0xe8] sm:$0xff] %v1782
        %1895 = vst [vmem:[%s233 + $0xf0] sm:$0xff] %v1783
        %1896 = vst [vmem:[%s233 + $0xf8] sm:$0xff] %v1784
        %1897 = vst [vmem:[%s233 + $0x100] sm:$0xff] %v1785
        %1898 = vst [vmem:[%s233 + $0x108] sm:$0xff] %v1786
        %1899 = vst [vmem:[%s233 + $0x110] sm:$0xff] %v1787
        %1900 = vst [vmem:[%s233 + $0x118] sm:$0xff] %v1788
        %1901 = vst [vmem:[%s233 + $0x120] sm:$0xff] %v1789
        %1902 = vst [vmem:[%s233 + $0x128] sm:$0xff] %v1790
        %1903 = vst [vmem:[%s233 + $0x130] sm:$0xff] %v1791
        %1904 = vst [vmem:[%s233 + $0x138] sm:$0xff] %v1792
        %1905 = vst [vmem:[%s233 + $0x140] sm:$0xff] %v1793
        %1906 = vst [vmem:[%s233 + $0x148] sm:$0xff] %v1794
        %1907 = vst [vmem:[%s233 + $0x150] sm:$0xff] %v1795
        %1908 = vst [vmem:[%s233 + $0x158] sm:$0xff] %v1796
        %1909 = vst [vmem:[%s233 + $0x160] sm:$0xff] %v1797
        %1910 = vst [vmem:[%s233 + $0x168] sm:$0xff] %v1798
        %1911 = vst [vmem:[%s233 + $0x170] sm:$0xff] %v1799
        %1912 = vst [vmem:[%s233 + $0x178] sm:$0xff] %v1800
        %1913 = vst [vmem:[%s233 + $0x180] sm:$0xff] %v1801
        %1914 = vst [vmem:[%s233 + $0x188] sm:$0xff] %v1802
        %1915 = vst [vmem:[%s233 + $0x190] sm:$0xff] %v1803
        %1916 = vst [vmem:[%s233 + $0x198] sm:$0xff] %v1804
        %1917 = vst [vmem:[%s233 + $0x1a0] sm:$0xff] %v1805
        %1918 = vst [vmem:[%s233 + $0x1a8] sm:$0xff] %v1806
        %1919 = vst [vmem:[%s233 + $0x1b0] sm:$0xff] %v1807
        %1920 = vst [vmem:[%s233 + $0x1b8] sm:$0xff] %v1808
        %1921 = vst [vmem:[%s233 + $0x1c0] sm:$0xff] %v1809
        %1922 = vst [vmem:[%s233 + $0x1c8] sm:$0xff] %v1810
        %1923 = vst [vmem:[%s233 + $0x1d0] sm:$0xff] %v1811
        %1924 = vst [vmem:[%s233 + $0x1d8] sm:$0xff] %v1812
        %1925 = vst [vmem:[%s233 + $0x1e0] sm:$0xff] %v1813
        %1926 = vst [vmem:[%s233 + $0x1e8] sm:$0xff] %v1814
        %1927 = vst [vmem:[%s233 + $0x1f0] sm:$0xff] %v1815
        %1928 = vst [vmem:[%s233 + $0x1f8] sm:$0xff] %v1816
        %1929 = vst [vmem:[%s233 + $0x200] sm:$0xff] %v1817
        %1930 = vst [vmem:[%s233 + $0x208] sm:$0xff] %v1818
        %1931 = vst [vmem:[%s233 + $0x210] sm:$0xff] %v1819
        %1932 = vst [vmem:[%s233 + $0x218] sm:$0xff] %v1820
        %1933 = vst [vmem:[%s233 + $0x220] sm:$0xff] %v1821
        %1934 = vst [vmem:[%s233 + $0x228] sm:$0xff] %v1822
        %1935 = vst [vmem:[%s233 + $0x230] sm:$0xff] %v1823
        %1936 = vst [vmem:[%s233 + $0x238] sm:$0xff] %v1824
        %1937 = vst [vmem:[%s233 + $0x240] sm:$0xff] %v1825
        %1938 = vst [vmem:[%s233 + $0x248] sm:$0xff] %v1826
        %1939 = vst [vmem:[%s233 + $0x250] sm:$0xff] %v1827
        %1940 = vst [vmem:[%s233 + $0x258] sm:$0xff] %v1828
        %1941 = vst [vmem:[%s233 + $0x260] sm:$0xff] %v1829
        %1942 = vst [vmem:[%s233 + $0x268] sm:$0xff] %v1830
        %1943 = vst [vmem:[%s233 + $0x270] sm:$0xff] %v1831
        %1944 = vst [vmem:[%s233 + $0x278] sm:$0xff] %v1832
        %1945 = vst [vmem:[%s233 + $0x280] sm:$0xff] %v1833
        %1946 = vst [vmem:[%s233 + $0x288] sm:$0xff] %v1834
        %1947 = vst [vmem:[%s233 + $0x290] sm:$0xff] %v1835
        %1948 = vst [vmem:[%s233 + $0x298] sm:$0xff] %v1836
        %1949 = vst [vmem:[%s233 + $0x2a0] sm:$0xff] %v1837
        %1950 = vst [vmem:[%s233 + $0x2a8] sm:$0xff] %v1838
        %1951 = vst [vmem:[%s233 + $0x2b0] sm:$0xff] %v1839
        %1952 = vst [vmem:[%s233 + $0x2b8] sm:$0xff] %v1840
        %1953 = vst [vmem:[%s233 + $0x2c0] sm:$0xff] %v1841
        %1954 = vst [vmem:[%s233 + $0x2c8] sm:$0xff] %v1842
        %1955 = vst [vmem:[%s233 + $0x2d0] sm:$0xff] %v1843
        %1956 = vst [vmem:[%s233 + $0x2d8] sm:$0xff] %v1844
        %1957 = vst [vmem:[%s233 + $0x2e0] sm:$0xff] %v1845
        %1958 = vst [vmem:[%s233 + $0x2e8] sm:$0xff] %v1846
        %1959 = vst [vmem:[%s233 + $0x2f0] sm:$0xff] %v1847
        %1960 = vst [vmem:[%s233 + $0x2f8] sm:$0xff] %v1848
        %1961 = vst [vmem:[%s233 + $0x300] sm:$0xff] %v1849
        %1962 = vst [vmem:[%s233 + $0x308] sm:$0xff] %v1850
        %1963 = vst [vmem:[%s233 + $0x310] sm:$0xff] %v1851
        %1964 = vst [vmem:[%s233 + $0x318] sm:$0xff] %v1852
        %1965 = vst [vmem:[%s233 + $0x320] sm:$0xff] %v1853
        %1966 = vst [vmem:[%s233 + $0x328] sm:$0xff] %v1854
        %1967 = vst [vmem:[%s233 + $0x330] sm:$0xff] %v1855
        %1968 = vst [vmem:[%s233 + $0x338] sm:$0xff] %v1856
        %1969 = vst [vmem:[%s233 + $0x340] sm:$0xff] %v1857
        %1970 = vst [vmem:[%s233 + $0x348] sm:$0xff] %v1858
        %1971 = vst [vmem:[%s233 + $0x350] sm:$0xff] %v1859
        %1972 = vst [vmem:[%s233 + $0x358] sm:$0xff] %v1860
        %1973 = vst [vmem:[%s233 + $0x360] sm:$0xff] %v1861
        %1974 = vst [vmem:[%s233 + $0x368] sm:$0xff] %v1862
        %1975 = vst [vmem:[%s233 + $0x370] sm:$0xff] %v1863
        %1976 = vst [vmem:[%s233 + $0x378] sm:$0xff] %v1864
        %s1977 = sand.u32 %s138, 1
        %s1978 = scalar_lea.sflag [#allocation4], %s1977
        %s1979 = sand.u32 %s138, 1
        %s1980 = smul.addr %s1979, 896
        %s1981 = scalar_lea.vmem [#allocation5], %s1980
        // Predicated region
        $region45: #{tpu_custom_call.1} parent=39 // pred_check
          %p1982 = pneg %p148
        $region46: #{tpu_custom_call.1} parent=39 // pred_check_branch
          %1984 = sbr.rel (%p1982) target = $region48
        $region47: #{tpu_custom_call.1} parent=39 // pred_region
          %s1985 = smul.u32 16, %s20
          %s1987 = ssub.s32 14336, 14336
          %1988 = vsyncadd %s1978, %s1987
          %s1989 = smul.addr %s1985, 7
          %s1990 = smul.addr %s1989, 128
          %s1991 = scalar_lea.hbm %s5, %s1990
          %s1992 = sshll.u32 %s1981, 4
          %s1993 = int_to_ptr.vmem [resolvable:$true] %s1992
          %1998 = dma.vmem_to_hbm [thread:$0]  %s1993, 14336, %s1991, %s1978, 896, 896, 56
        $region48: #{tpu_custom_call.1} parent=39 // pred_fallthru
          _
      $region40: #{tpu_custom_call.1} parent=5 // pred_fallthru
        _
      %p1999 = scmp.le.s32.totalorder 2, %s15
      // Predicated region
      $region49: #{tpu_custom_call.1} parent=5 // pred_check
        %p2000 = pneg %p1999
      $region50: #{tpu_custom_call.1} parent=5 // pred_check_branch
        %2002 = sbr.rel (%p2000) target = $region52
      $region51: #{tpu_custom_call.1} parent=5 // pred_region
        %s2003 = ssub.s32 %s15, 2
        // Predicated region
        $region53: #{tpu_custom_call.1} parent=51 // pred_check
          %p2004 = pneg %p154
        $region54: #{tpu_custom_call.1} parent=51 // pred_check_branch
          %2006 = sbr.rel (%p2004) target = $region56
        $region55: #{tpu_custom_call.1} parent=51 // pred_region
          %s2007 = sand.u32 %s139, 1
          %s2008 = scalar_lea.sflag [#allocation4], %s2007
          %s2009 = sand.u32 %s139, 1
          %s2010 = smul.addr %s2009, 896
          %s2011 = scalar_lea.vmem [#allocation5], %s2010
          %2012 = dma.done %s2008, 14336
        $region56: #{tpu_custom_call.1} parent=51 // pred_fallthru
          _
      $region52: #{tpu_custom_call.1} parent=5 // pred_fallthru
        _
    $region6: #{tpu_custom_call.1} parent=1 // loop_footer
      %s19 = sadd.s32 1, %s15
    $region7: #{tpu_custom_call.1} parent=1 // loop_footer_branch
      %14 = sbr.rel target = $region3
    $region8: #{tpu_custom_call.1} parent=1 // loop_exit
      _
    %2013 = vsyncpa [#allocation3], 1
    %s2014 = scalar_lea.sflag [#allocation3], 1
    %2015 = vsyncpa %s2014, 1
    %2016 = vsyncpa [#allocation4], 1
    %s2017 = scalar_lea.sflag [#allocation4], 1
    %2018 = vsyncpa %s2017, 1

</llo_original>
